<compile_context>
chip_gen: v7x
topology: tpu7x:2x2x1
jax: 0.10.0
libtpu: 0.0.40
codegen_flags: <defaults>
</compile_context>

<pallas_src>
import functools
import math

import jax
import jax.numpy as jnp
from jax.experimental import pallas as pl
from jax.experimental.pallas import tpu as pltpu


_VMEM_LIMIT = 48 * 1024 * 1024  # fits v7x's 64 MiB physical VMEM with headroom


# ---------------------------------------------------------------------------
# helpers
# ---------------------------------------------------------------------------
def _round_up(x, m):
    return (x + m - 1) // m * m


def _fit_tile(dim, tile, align):
    """Return (tile, padded_dim). If the dim fits in one tile, use the full dim."""
    if dim <= tile:
        return dim, dim
    tile = _round_up(tile, align)
    return tile, _round_up(dim, tile)


def _pad_to(a, shape):
    pads = [(0, t - s) for s, t in zip(a.shape, shape)]
    if all(p == (0, 0) for p in pads):
        return a
    return jnp.pad(a, pads)


def _gelu_tanh(x):
    c = math.sqrt(2.0 / math.pi)
    return 0.5 * x * (1.0 + jnp.tanh(c * (x + 0.044715 * x * x * x)))


# ---------------------------------------------------------------------------
# K-tiled matmul + bias (+ optional fused GELU)
# ---------------------------------------------------------------------------
def _linear_kernel(x_ref, w_ref, b_ref, o_ref, acc_ref, *, activation):
    k = pl.program_id(2)

    @pl.when(k == 0)
    def _():
        acc_ref[...] = jnp.zeros_like(acc_ref)

    acc_ref[...] += jnp.dot(x_ref[...], w_ref[...],
                            preferred_element_type=jnp.float32)

    @pl.when(k == pl.num_programs(2) - 1)
    def _():
        out = acc_ref[...] + b_ref[...].astype(jnp.float32)
        if activation == "gelu":
            out = _gelu_tanh(out)
        o_ref[...] = out.astype(o_ref.dtype)


def linear_pallas(x, w, b, *, activation=None, tm=256, tn=512, tk=512,
                  compute_dtype=None):
    """y = activation(x @ w + b). x: (M, K), w: (K, N) pre-transposed, b: (N,)."""
    M, K = x.shape
    Kw, N = w.shape
    assert K == Kw
    out_dtype = x.dtype
    if compute_dtype is not None:  # e.g. jnp.bfloat16 on v6e/v7x (f32 accumulate)
        x = x.astype(compute_dtype)
        w = w.astype(compute_dtype)

    tm, Mp = _fit_tile(M, tm, 8)
    tn, Np = _fit_tile(N, tn, 128)
    tk, Kp = _fit_tile(K, tk, 128)

    xp = _pad_to(x, (Mp, Kp))
    wp = _pad_to(w, (Kp, Np))
    bp = _pad_to(b.reshape(1, N), (1, Np))

    grid = (Mp // tm, Np // tn, Kp // tk)
    out = pl.pallas_call(
        functools.partial(_linear_kernel, activation=activation),
        out_shape=jax.ShapeDtypeStruct((Mp, Np), out_dtype),
        grid_spec=pltpu.PrefetchScalarGridSpec(
            num_scalar_prefetch=0,
            grid=grid,
            in_specs=[
                pl.BlockSpec((tm, tk), lambda i, j, k: (i, k)),
                pl.BlockSpec((tk, tn), lambda i, j, k: (k, j)),
                pl.BlockSpec((1, tn), lambda i, j, k: (0, j)),
            ],
            out_specs=pl.BlockSpec((tm, tn), lambda i, j, k: (i, j)),
            scratch_shapes=[pltpu.VMEM((tm, tn), jnp.float32)],
        ),
        compiler_params=pltpu.CompilerParams(
            dimension_semantics=("parallel", "parallel", "arbitrary"),
            vmem_limit_bytes=_VMEM_LIMIT,
        ),
    )(xp, wp, bp)
    return out[:M, :N]


# ---------------------------------------------------------------------------
# Per-(batch, head) attention: softmax(q k^T * scale, masked) @ v
# ---------------------------------------------------------------------------
def _attention_kernel(q_ref, k_ref, v_ref, mask_ref, o_ref, *, scale):
    q = q_ref[...].astype(jnp.float32)   # (S, Dh)
    k = k_ref[...].astype(jnp.float32)   # (S, Dh)
    v = v_ref[...]                       # (S, Dh)
    # energy = (q @ k^T) * scale — contract the head dim, no explicit transpose.
    s = jax.lax.dot_general(q, k, (((1,), (1,)), ((), ())),
                            preferred_element_type=jnp.float32) * scale
    s = jnp.where(mask_ref[...] == 0.0, -1.0e10, s)       # masked_fill(mask==0, -1e10)
    s = s - jnp.max(s, axis=-1, keepdims=True)
    p = jnp.exp(s)
    p = p / jnp.sum(p, axis=-1, keepdims=True)
    o = jnp.dot(p.astype(v.dtype), v, preferred_element_type=jnp.float32)
    o_ref[...] = o.astype(o_ref.dtype)


def attention_pallas(q, k, v, mask, *, scale):
    """q, k, v: (B, H, S, Dh); mask: (B, 1, S) float (0.0 = masked key)."""
    B, H, S, Dh = q.shape
    qkv_spec = pl.BlockSpec((None, None, S, Dh), lambda b, h: (b, h, 0, 0))
    return pl.pallas_call(
        functools.partial(_attention_kernel, scale=scale),
        out_shape=jax.ShapeDtypeStruct((B, H, S, Dh), q.dtype),
        grid_spec=pltpu.PrefetchScalarGridSpec(
            num_scalar_prefetch=0,
            grid=(B, H),
            in_specs=[
                qkv_spec, qkv_spec, qkv_spec,
                pl.BlockSpec((None, 1, S), lambda b, h: (b, 0, 0)),
            ],
            out_specs=qkv_spec,
        ),
        compiler_params=pltpu.CompilerParams(
            dimension_semantics=("parallel", "parallel"),
            vmem_limit_bytes=_VMEM_LIMIT,
        ),
    )(q, k, v, mask)


# ---------------------------------------------------------------------------
# Fused residual add + LayerNorm
# ---------------------------------------------------------------------------
def _add_layernorm_kernel(x_ref, y_ref, g_ref, b_ref, o_ref, *, eps):
    x = x_ref[...].astype(jnp.float32) + y_ref[...].astype(jnp.float32)
    mean = jnp.mean(x, axis=-1, keepdims=True)
    c = x - mean
    var = jnp.mean(c * c, axis=-1, keepdims=True)
    inv = jax.lax.rsqrt(var + eps)
    o_ref[...] = (c * inv * g_ref[...] + b_ref[...]).astype(o_ref.dtype)


def add_layernorm_pallas(x, y, gamma, beta, *, eps=1e-3, tm=256):
    """LayerNorm(x + y) over the last dim. x, y: (M, E)."""
    M, E = x.shape
    tm, Mp = _fit_tile(M, tm, 8)
    xp = _pad_to(x, (Mp, E))
    yp = _pad_to(y, (Mp, E))
    g2 = gamma.reshape(1, E)
    b2 = beta.reshape(1, E)
    out = pl.pallas_call(
        functools.partial(_add_layernorm_kernel, eps=eps),
        out_shape=jax.ShapeDtypeStruct((Mp, E), x.dtype),
        grid_spec=pltpu.PrefetchScalarGridSpec(
            num_scalar_prefetch=0,
            grid=(Mp // tm,),
            in_specs=[
                pl.BlockSpec((tm, E), lambda i: (i, 0)),
                pl.BlockSpec((tm, E), lambda i: (i, 0)),
                pl.BlockSpec((1, E), lambda i: (0, 0)),
                pl.BlockSpec((1, E), lambda i: (0, 0)),
            ],
            out_specs=pl.BlockSpec((tm, E), lambda i: (i, 0)),
        ),
        compiler_params=pltpu.CompilerParams(
            dimension_semantics=("parallel",),
            vmem_limit_bytes=_VMEM_LIMIT,
        ),
    )(xp, yp, g2, b2)
    return out[:M]


# ---------------------------------------------------------------------------
# Full TransformerEncoderLayer forward
# ---------------------------------------------------------------------------
@functools.partial(jax.jit, static_argnames=("n_heads", "eps", "compute_dtype"))
def transformer_encoder_layer_forward(embedded, mask, params, *, n_heads,
                                      eps=1e-3, compute_dtype=None):
    """embedded: (B, S, E); mask: (B, 1, 1, S) with 0 = masked key (or None)."""
    B, S, E = embedded.shape
    Dh = E // n_heads
    scale = float(Dh) ** -0.5
    M = B * S
    x2 = embedded.reshape(M, E)

    lin = functools.partial(linear_pallas, compute_dtype=compute_dtype)

    # --- multi-head self attention ------------------------------------------
    q = lin(x2, params["wq"], params["bq"])
    k = lin(x2, params["wk"], params["bk"])
    v = lin(x2, params["wv"], params["bv"])

    def split_heads(z):
        return z.reshape(B, S, n_heads, Dh).transpose(0, 2, 1, 3)  # (B, H, S, Dh)

    if mask is None:
        mask3 = jnp.ones((B, 1, S), dtype=jnp.float32)
    else:
        mask3 = mask.reshape(B, 1, S).astype(jnp.float32)

    attn = attention_pallas(split_heads(q), split_heads(k), split_heads(v),
                            mask3, scale=scale)                    # (B, H, S, Dh)
    weighted = attn.transpose(0, 2, 1, 3).reshape(M, E)
    attn_out = lin(weighted, params["wo"], params["bo"])

    h1 = add_layernorm_pallas(x2, attn_out, params["ln1_g"], params["ln1_b"],
                              eps=eps)

    # --- position-wise feed-forward -------------------------------------------
    ff = lin(h1, params["w1"], params["b1"], activation="gelu")
    ff = lin(ff, params["w2"], params["b2"])

    h2 = add_layernorm_pallas(h1, ff, params["ln2_g"], params["ln2_b"], eps=eps)
    return h2.reshape(B, S, E)


# ---------------------------------------------------------------------------
# Pure-JAX reference (same math as the PyTorch module, eval mode)
# ---------------------------------------------------------------------------
def _reference_forward(embedded, mask, params, *, n_heads, eps=1e-3):
    B, S, E = embedded.shape
    Dh = E // n_heads
    scale = float(Dh) ** -0.5

    def lin(z, w, b):
        return z @ w + b

    q = lin(embedded, params["wq"], params["bq"])
    k = lin(embedded, params["wk"], params["bk"])
    v = lin(embedded, params["wv"], params["bv"])

    def split(z):
        return z.reshape(B, S, n_heads, Dh).transpose(0, 2, 1, 3)

    qh, kh, vh = split(q), split(k), split(v)
    energy = jnp.einsum("bhqd,bhkd->bhqk", qh, kh) * scale
    energy = jnp.where(mask == 0, -1.0e10, energy)
    attn = jax.nn.softmax(energy, axis=-1)
    weighted = jnp.einsum("bhqk,bhkd->bhqd", attn, vh)
    weighted = weighted.transpose(0, 2, 1, 3).reshape(B, S, E)
    attn_out = lin(weighted, params["wo"], params["bo"])

    def layernorm(z, g, b):
        m = z.mean(-1, keepdims=True)
        var = ((z - m) ** 2).mean(-1, keepdims=True)
        return (z - m) / jnp.sqrt(var + eps) * g + b

    h1 = layernorm(embedded + attn_out, params["ln1_g"], params["ln1_b"])
    ff = _gelu_tanh(lin(h1, params["w1"], params["b1"]))
    ff = lin(ff, params["w2"], params["b2"])
    h2 = layernorm(h1 + ff, params["ln2_g"], params["ln2_b"])
    return h2


if __name__ == "__main__":
    # Small shapes: batch=2, seq=8, emb_dim=32, heads=4, hid_dim=64.
    B, S, E, HEADS, HID = 2, 8, 32, 4, 64

    key = jax.random.PRNGKey(0)
    keys = jax.random.split(key, 8)

    def linear_init(k, fan_in, fan_out):
        kw, kb = jax.random.split(k)
        bound = 1.0 / math.sqrt(fan_in)
        # Weights stored pre-transposed as (in, out) so no per-call transpose is needed.
        w = jax.random.uniform(kw, (fan_in, fan_out), minval=-bound, maxval=bound,
                               dtype=jnp.float32)
        b = jax.random.uniform(kb, (fan_out,), minval=-bound, maxval=bound,
                               dtype=jnp.float32)
        return w, b

    wq, bq = linear_init(keys[0], E, E)
    wk, bk = linear_init(keys[1], E, E)
    wv, bv = linear_init(keys[2], E, E)
    wo, bo = linear_init(keys[3], E, E)
    w1, b1 = linear_init(keys[4], E, HID)
    w2, b2 = linear_init(keys[5], HID, E)

    params = dict(
        wq=wq, bq=bq, wk=wk, bk=bk, wv=wv, bv=bv, wo=wo, bo=bo,
        w1=w1, b1=b1, w2=w2, b2=b2,
        ln1_g=jnp.ones((E,), jnp.float32), ln1_b=jnp.zeros((E,), jnp.float32),
        ln2_g=jnp.ones((E,), jnp.float32), ln2_b=jnp.zeros((E,), jnp.float32),
    )

    embedded = jax.random.normal(keys[6], (B, S, E), dtype=jnp.float32)
    mask = jnp.ones((B, 1, 1, S), dtype=jnp.float32)
    mask = mask.at[1, :, :, S - 2:].set(0.0)   # mask out last two keys of batch 1

    out = transformer_encoder_layer_forward(embedded, mask, params, n_heads=HEADS)
    out = jax.block_until_ready(out)

    ref = _reference_forward(embedded, mask, params, n_heads=HEADS)

    assert out.shape == (B, S, E)
    max_err = float(jnp.max(jnp.abs(out - ref)))
    assert jnp.allclose(out, ref, atol=1e-3, rtol=1e-3), max_err

    print("KERNEL_OK")
</pallas_src>

<mosaic_0001>
module attributes {stable_mosaic.version = 11 : i64} {
  func.func @_linear_kernel(%arg0: i32, %arg1: i32, %arg2: i32, %arg3: memref<16x32xf32, #tpu.memory_space<vmem>>, %arg4: memref<32x32xf32, #tpu.memory_space<vmem>>, %arg5: memref<1x32xf32, #tpu.memory_space<vmem>>, %arg6: memref<16x32xf32, #tpu.memory_space<vmem>>, %arg7: memref<16x32xf32, #tpu.memory_space<vmem>>) attributes {dimension_semantics = [#tpu.dimension_semantics<parallel>, #tpu.dimension_semantics<parallel>, #tpu.dimension_semantics<arbitrary>], iteration_bounds = array<i64: 1, 1, 1>, scalar_prefetch = 0 : i64, scratch_operands = 1 : i64, tpu.core_type = #tpu.core_type<tc>, window_params = [{transform_indices = @transform_0, window_bounds = array<i64: 16, 32>}, {transform_indices = @transform_1, window_bounds = array<i64: 32, 32>}, {transform_indices = @transform_2, window_bounds = array<i64: 1, 32>}, {transform_indices = @transform_3, window_bounds = array<i64: 16, 32>}]} {
    %c0_i32 = arith.constant 0 : i32
    %0 = arith.cmpi eq, %arg2, %c0_i32 : i32
    %1 = arith.extui %0 : i1 to i32
    %c0_i32_0 = arith.constant 0 : i32
    %2 = arith.cmpi ne, %1, %c0_i32_0 : i32
    scf.if %2 {
      %cst_10 = arith.constant 0.000000e+00 : f32
      %12 = vector.broadcast %cst_10 : f32 to vector<16x32xf32>
      %c0_11 = arith.constant 0 : index
      %c0_12 = arith.constant 0 : index
      %13 = vector.load %arg7[%c0_11, %c0_12] : memref<16x32xf32, #tpu.memory_space<vmem>>, vector<16x32xf32>
      tpu.vector_store %arg7[%c0_11, %c0_12], %12 {strides = array<i32>} : memref<16x32xf32, #tpu.memory_space<vmem>>, vector<16x32xf32>,
    } else {
    }
    %c0 = arith.constant 0 : index
    %c0_1 = arith.constant 0 : index
    %3 = vector.load %arg7[%c0, %c0_1] : memref<16x32xf32, #tpu.memory_space<vmem>>, vector<16x32xf32>
    %c0_2 = arith.constant 0 : index
    %c0_3 = arith.constant 0 : index
    %4 = vector.load %arg3[%c0_2, %c0_3] : memref<16x32xf32, #tpu.memory_space<vmem>>, vector<16x32xf32>
    %c0_4 = arith.constant 0 : index
    %c0_5 = arith.constant 0 : index
    %5 = vector.load %arg4[%c0_4, %c0_5] : memref<32x32xf32, #tpu.memory_space<vmem>>, vector<32x32xf32>
    %cst = arith.constant dense<0.000000e+00> : vector<16x32xf32>
    %6 = tpu.matmul %4, %5, %cst {dimension_numbers = #tpu.dot_dimension_numbers<[1], [0], [0], [1], [0, 0, 1, 1], [], []>} : vector<16x32xf32>, vector<32x32xf32>, vector<16x32xf32> -> vector<16x32xf32>
    %7 = arith.addf %3, %6 : vector<16x32xf32>
    %c0_6 = arith.constant 0 : index
    %c0_7 = arith.constant 0 : index
    %8 = vector.load %arg7[%c0_6, %c0_7] : memref<16x32xf32, #tpu.memory_space<vmem>>, vector<16x32xf32>
    tpu.vector_store %arg7[%c0_6, %c0_7], %7 {strides = array<i32>} : memref<16x32xf32, #tpu.memory_space<vmem>>, vector<16x32xf32>,
    %c0_i32_8 = arith.constant 0 : i32
    %9 = arith.cmpi eq, %arg2, %c0_i32_8 : i32
    %10 = arith.extui %9 : i1 to i32
    %c0_i32_9 = arith.constant 0 : i32
    %11 = arith.cmpi ne, %10, %c0_i32_9 : i32
    scf.if %11 {
      %c0_10 = arith.constant 0 : index
      %c0_11 = arith.constant 0 : index
      %12 = vector.load %arg7[%c0_10, %c0_11] : memref<16x32xf32, #tpu.memory_space<vmem>>, vector<16x32xf32>
      %c0_12 = arith.constant 0 : index
      %c0_13 = arith.constant 0 : index
      %13 = vector.load %arg5[%c0_12, %c0_13] : memref<1x32xf32, #tpu.memory_space<vmem>>, vector<1x32xf32>
      %14 = vector.broadcast %13 : vector<1x32xf32> to vector<16x32xf32>
      %15 = arith.addf %12, %14 : vector<16x32xf32>
      %c0_14 = arith.constant 0 : index
      %c0_15 = arith.constant 0 : index
      %16 = vector.load %arg6[%c0_14, %c0_15] : memref<16x32xf32, #tpu.memory_space<vmem>>, vector<16x32xf32>
      tpu.vector_store %arg6[%c0_14, %c0_15], %15 {strides = array<i32>} : memref<16x32xf32, #tpu.memory_space<vmem>>, vector<16x32xf32>,
    } else {
    }
    return
  }
  func.func @transform_0(%arg0: i32, %arg1: i32, %arg2: i32) -> (i32, i32) {
    %c0_i32 = arith.constant 0 : i32
    return %arg0, %arg2 : i32, i32
  }
  func.func @transform_1(%arg0: i32, %arg1: i32, %arg2: i32) -> (i32, i32) {
    %c0_i32 = arith.constant 0 : i32
    return %arg2, %arg1 : i32, i32
  }
  func.func @transform_2(%arg0: i32, %arg1: i32, %arg2: i32) -> (i32, i32) {
    %c0_i32 = arith.constant 0 : i32
    %c0_i32_0 = arith.constant 0 : i32
    return %c0_i32, %arg1 : i32, i32
  }
  func.func @transform_3(%arg0: i32, %arg1: i32, %arg2: i32) -> (i32, i32) {
    %c0_i32 = arith.constant 0 : i32
    return %arg0, %arg1 : i32, i32
  }
}

module attributes {stable_mosaic.version = 11 : i64} {
  func.func @_attention_kernel(%arg0: i32, %arg1: i32, %arg2: memref<1x1x8x8xf32, #tpu.memory_space<vmem>>, %arg3: memref<1x1x8x8xf32, #tpu.memory_space<vmem>>, %arg4: memref<1x1x8x8xf32, #tpu.memory_space<vmem>>, %arg5: memref<1x1x8xf32, #tpu.memory_space<vmem>>, %arg6: memref<1x1x8x8xf32, #tpu.memory_space<vmem>>) attributes {dimension_semantics = [#tpu.dimension_semantics<parallel>, #tpu.dimension_semantics<parallel>], iteration_bounds = array<i64: 2, 4>, scalar_prefetch = 0 : i64, scratch_operands = 0 : i64, tpu.core_type = #tpu.core_type<tc>, window_params = [{transform_indices = @transform_0, window_bounds = array<i64: 1, 1, 8, 8>}, {transform_indices = @transform_1, window_bounds = array<i64: 1, 1, 8, 8>}, {transform_indices = @transform_2, window_bounds = array<i64: 1, 1, 8, 8>}, {transform_indices = @transform_3, window_bounds = array<i64: 1, 1, 8>}, {transform_indices = @transform_4, window_bounds = array<i64: 1, 1, 8, 8>}]} {
    %c0 = arith.constant 0 : index
    %c0_0 = arith.constant 0 : index
    %c0_1 = arith.constant 0 : index
    %c0_2 = arith.constant 0 : index
    %0 = vector.load %arg2[%c0, %c0_0, %c0_1, %c0_2] : memref<1x1x8x8xf32, #tpu.memory_space<vmem>>, vector<1x1x8x8xf32>
    %1 = vector.shape_cast %0 : vector<1x1x8x8xf32> to vector<8x8xf32>
    %c0_3 = arith.constant 0 : index
    %c0_4 = arith.constant 0 : index
    %c0_5 = arith.constant 0 : index
    %c0_6 = arith.constant 0 : index
    %2 = vector.load %arg3[%c0_3, %c0_4, %c0_5, %c0_6] : memref<1x1x8x8xf32, #tpu.memory_space<vmem>>, vector<1x1x8x8xf32>
    %3 = vector.shape_cast %2 : vector<1x1x8x8xf32> to vector<8x8xf32>
    %c0_7 = arith.constant 0 : index
    %c0_8 = arith.constant 0 : index
    %c0_9 = arith.constant 0 : index
    %c0_10 = arith.constant 0 : index
    %4 = vector.load %arg4[%c0_7, %c0_8, %c0_9, %c0_10] : memref<1x1x8x8xf32, #tpu.memory_space<vmem>>, vector<1x1x8x8xf32>
    %5 = vector.shape_cast %4 : vector<1x1x8x8xf32> to vector<8x8xf32>
    %cst = arith.constant dense<0.000000e+00> : vector<8x8xf32>
    %6 = tpu.matmul %1, %3, %cst {dimension_numbers = #tpu.dot_dimension_numbers<[1], [1], [0], [0], [0, 0, 1, 0], [], []>} : vector<8x8xf32>, vector<8x8xf32>, vector<8x8xf32> -> vector<8x8xf32>
    %cst_11 = arith.constant 0.353553385 : f32
    %7 = vector.broadcast %cst_11 : f32 to vector<8x8xf32>
    %8 = arith.mulf %6, %7 : vector<8x8xf32>
    %c0_12 = arith.constant 0 : index
    %c0_13 = arith.constant 0 : index
    %c0_14 = arith.constant 0 : index
    %9 = vector.load %arg5[%c0_12, %c0_13, %c0_14] : memref<1x1x8xf32, #tpu.memory_space<vmem>>, vector<1x1x8xf32>
    %10 = vector.shape_cast %9 : vector<1x1x8xf32> to vector<1x8xf32>
    %cst_15 = arith.constant 0.000000e+00 : f32
    %11 = vector.broadcast %cst_15 : f32 to vector<1x8xf32>
    %12 = arith.cmpf oeq, %10, %11 : vector<1x8xf32>
    %cst_16 = arith.constant -1.000000e+10 : f32
    %13 = vector.shape_cast %12 : vector<1x8xi1> to vector<1x8xi1>
    %14 = vector.broadcast %13 : vector<1x8xi1> to vector<8x8xi1>
    %15 = vector.broadcast %cst_16 : f32 to vector<8x8xf32>
    %16 = arith.select %14, %15, %8 : vector<8x8xi1>, vector<8x8xf32>
    %cst_17 = arith.constant dense<0xFF800000> : vector<8xf32>
    %17 = vector.multi_reduction <maximumf>, %16, %cst_17 [1] : vector<8x8xf32> to vector<8xf32>
    %18 = vector.shape_cast %17 : vector<8xf32> to vector<8x1xf32>
    %19 = vector.broadcast %18 : vector<8x1xf32> to vector<8x8xf32>
    %20 = arith.subf %16, %19 : vector<8x8xf32>
    %21 = math.exp %20 : vector<8x8xf32>
    %cst_18 = arith.constant dense<0.000000e+00> : vector<8xf32>
    %22 = vector.multi_reduction <add>, %21, %cst_18 [1] : vector<8x8xf32> to vector<8xf32>
    %23 = vector.shape_cast %22 : vector<8xf32> to vector<8x1xf32>
    %24 = vector.broadcast %23 : vector<8x1xf32> to vector<8x8xf32>
    %25 = arith.divf %21, %24 : vector<8x8xf32>
    %cst_19 = arith.constant dense<0.000000e+00> : vector<8x8xf32>
    %26 = tpu.matmul %25, %5, %cst_19 {dimension_numbers = #tpu.dot_dimension_numbers<[1], [0], [0], [1], [0, 0, 1, 1], [], []>} : vector<8x8xf32>, vector<8x8xf32>, vector<8x8xf32> -> vector<8x8xf32>
    %c0_20 = arith.constant 0 : index
    %c0_21 = arith.constant 0 : index
    %c0_22 = arith.constant 0 : index
    %c0_23 = arith.constant 0 : index
    %27 = vector.load %arg6[%c0_20, %c0_21, %c0_22, %c0_23] : memref<1x1x8x8xf32, #tpu.memory_space<vmem>>, vector<1x1x8x8xf32>
    %28 = vector.shape_cast %27 : vector<1x1x8x8xf32> to vector<8x8xf32>
    %29 = vector.shape_cast %26 : vector<8x8xf32> to vector<1x1x8x8xf32>
    tpu.vector_store %arg6[%c0_20, %c0_21, %c0_22, %c0_23], %29 {strides = array<i32>} : memref<1x1x8x8xf32, #tpu.memory_space<vmem>>, vector<1x1x8x8xf32>,
    return
  }
  func.func @transform_0(%arg0: i32, %arg1: i32) -> (i32, i32, i32, i32) {
    %c0_i32 = arith.constant 0 : i32
    %c0_i32_0 = arith.constant 0 : i32
    %c0_i32_1 = arith.constant 0 : i32
    return %arg0, %arg1, %c0_i32, %c0_i32_0 : i32, i32, i32, i32
  }
  func.func @transform_1(%arg0: i32, %arg1: i32) -> (i32, i32, i32, i32) {
    %c0_i32 = arith.constant 0 : i32
    %c0_i32_0 = arith.constant 0 : i32
    %c0_i32_1 = arith.constant 0 : i32
    return %arg0, %arg1, %c0_i32, %c0_i32_0 : i32, i32, i32, i32
  }
  func.func @transform_2(%arg0: i32, %arg1: i32) -> (i32, i32, i32, i32) {
    %c0_i32 = arith.constant 0 : i32
    %c0_i32_0 = arith.constant 0 : i32
    %c0_i32_1 = arith.constant 0 : i32
    return %arg0, %arg1, %c0_i32, %c0_i32_0 : i32, i32, i32, i32
  }
  func.func @transform_3(%arg0: i32, %arg1: i32) -> (i32, i32, i32) {
    %c0_i32 = arith.constant 0 : i32
    %c0_i32_0 = arith.constant 0 : i32
    %c0_i32_1 = arith.constant 0 : i32
    return %arg0, %c0_i32, %c0_i32_0 : i32, i32, i32
  }
  func.func @transform_4(%arg0: i32, %arg1: i32) -> (i32, i32, i32, i32) {
    %c0_i32 = arith.constant 0 : i32
    %c0_i32_0 = arith.constant 0 : i32
    %c0_i32_1 = arith.constant 0 : i32
    return %arg0, %arg1, %c0_i32, %c0_i32_0 : i32, i32, i32, i32
  }
}

module attributes {stable_mosaic.version = 11 : i64} {
  func.func @_add_layernorm_kernel(%arg0: i32, %arg1: memref<16x32xf32, #tpu.memory_space<vmem>>, %arg2: memref<16x32xf32, #tpu.memory_space<vmem>>, %arg3: memref<1x32xf32, #tpu.memory_space<vmem>>, %arg4: memref<1x32xf32, #tpu.memory_space<vmem>>, %arg5: memref<16x32xf32, #tpu.memory_space<vmem>>) attributes {dimension_semantics = [#tpu.dimension_semantics<parallel>], iteration_bounds = array<i64: 1>, scalar_prefetch = 0 : i64, scratch_operands = 0 : i64, tpu.core_type = #tpu.core_type<tc>, window_params = [{transform_indices = @transform_0, window_bounds = array<i64: 16, 32>}, {transform_indices = @transform_1, window_bounds = array<i64: 16, 32>}, {pipeline_mode = #tpu.pipeline_mode<synchronous>, transform_indices = @transform_2, window_bounds = array<i64: 1, 32>}, {pipeline_mode = #tpu.pipeline_mode<synchronous>, transform_indices = @transform_3, window_bounds = array<i64: 1, 32>}, {transform_indices = @transform_4, window_bounds = array<i64: 16, 32>}]} {
    %c0 = arith.constant 0 : index
    %c0_0 = arith.constant 0 : index
    %0 = vector.load %arg1[%c0, %c0_0] : memref<16x32xf32, #tpu.memory_space<vmem>>, vector<16x32xf32>
    %c0_1 = arith.constant 0 : index
    %c0_2 = arith.constant 0 : index
    %1 = vector.load %arg2[%c0_1, %c0_2] : memref<16x32xf32, #tpu.memory_space<vmem>>, vector<16x32xf32>
    %2 = arith.addf %0, %1 : vector<16x32xf32>
    %cst = arith.constant dense<0.000000e+00> : vector<16xf32>
    %3 = vector.multi_reduction <add>, %2, %cst [1] : vector<16x32xf32> to vector<16xf32>
    %4 = vector.shape_cast %3 : vector<16xf32> to vector<16x1xf32>
    %cst_3 = arith.constant 3.200000e+01 : f32
    %5 = vector.broadcast %cst_3 : f32 to vector<16x1xf32>
    %6 = arith.divf %4, %5 : vector<16x1xf32>
    %7 = vector.broadcast %6 : vector<16x1xf32> to vector<16x32xf32>
    %8 = arith.subf %2, %7 : vector<16x32xf32>
    %9 = arith.mulf %8, %8 : vector<16x32xf32>
    %cst_4 = arith.constant dense<0.000000e+00> : vector<16xf32>
    %10 = vector.multi_reduction <add>, %9, %cst_4 [1] : vector<16x32xf32> to vector<16xf32>
    %11 = vector.shape_cast %10 : vector<16xf32> to vector<16x1xf32>
    %cst_5 = arith.constant 3.200000e+01 : f32
    %12 = vector.broadcast %cst_5 : f32 to vector<16x1xf32>
    %13 = arith.divf %11, %12 : vector<16x1xf32>
    %cst_6 = arith.constant 1.000000e-03 : f32
    %14 = vector.broadcast %cst_6 : f32 to vector<16x1xf32>
    %15 = arith.addf %13, %14 : vector<16x1xf32>
    %16 = math.rsqrt %15 : vector<16x1xf32>
    %17 = vector.broadcast %16 : vector<16x1xf32> to vector<16x32xf32>
    %18 = arith.mulf %8, %17 : vector<16x32xf32>
    %c0_7 = arith.constant 0 : index
    %c0_8 = arith.constant 0 : index
    %19 = vector.load %arg3[%c0_7, %c0_8] : memref<1x32xf32, #tpu.memory_space<vmem>>, vector<1x32xf32>
    %20 = vector.broadcast %19 : vector<1x32xf32> to vector<16x32xf32>
    %21 = arith.mulf %18, %20 : vector<16x32xf32>
    %c0_9 = arith.constant 0 : index
    %c0_10 = arith.constant 0 : index
    %22 = vector.load %arg4[%c0_9, %c0_10] : memref<1x32xf32, #tpu.memory_space<vmem>>, vector<1x32xf32>
    %23 = vector.broadcast %22 : vector<1x32xf32> to vector<16x32xf32>
    %24 = arith.addf %21, %23 : vector<16x32xf32>
    %c0_11 = arith.constant 0 : index
    %c0_12 = arith.constant 0 : index
    %25 = vector.load %arg5[%c0_11, %c0_12] : memref<16x32xf32, #tpu.memory_space<vmem>>, vector<16x32xf32>
    tpu.vector_store %arg5[%c0_11, %c0_12], %24 {strides = array<i32>} : memref<16x32xf32, #tpu.memory_space<vmem>>, vector<16x32xf32>,
    return
  }
  func.func @transform_0(%arg0: i32) -> (i32, i32) {
    %c0_i32 = arith.constant 0 : i32
    %c0_i32_0 = arith.constant 0 : i32
    return %arg0, %c0_i32 : i32, i32
  }
  func.func @transform_1(%arg0: i32) -> (i32, i32) {
    %c0_i32 = arith.constant 0 : i32
    %c0_i32_0 = arith.constant 0 : i32
    return %arg0, %c0_i32 : i32, i32
  }
  func.func @transform_2(%arg0: i32) -> (i32, i32) {
    %c0_i32 = arith.constant 0 : i32
    %c0_i32_0 = arith.constant 0 : i32
    %c0_i32_1 = arith.constant 0 : i32
    return %c0_i32, %c0_i32_0 : i32, i32
  }
  func.func @transform_3(%arg0: i32) -> (i32, i32) {
    %c0_i32 = arith.constant 0 : i32
    %c0_i32_0 = arith.constant 0 : i32
    %c0_i32_1 = arith.constant 0 : i32
    return %c0_i32, %c0_i32_0 : i32, i32
  }
  func.func @transform_4(%arg0: i32) -> (i32, i32) {
    %c0_i32 = arith.constant 0 : i32
    %c0_i32_0 = arith.constant 0 : i32
    return %arg0, %c0_i32 : i32, i32
  }
}

module attributes {stable_mosaic.version = 11 : i64} {
  func.func @_linear_kernel(%arg0: i32, %arg1: i32, %arg2: i32, %arg3: memref<16x32xf32, #tpu.memory_space<vmem>>, %arg4: memref<32x64xf32, #tpu.memory_space<vmem>>, %arg5: memref<1x64xf32, #tpu.memory_space<vmem>>, %arg6: memref<16x64xf32, #tpu.memory_space<vmem>>, %arg7: memref<16x64xf32, #tpu.memory_space<vmem>>) attributes {dimension_semantics = [#tpu.dimension_semantics<parallel>, #tpu.dimension_semantics<parallel>, #tpu.dimension_semantics<arbitrary>], iteration_bounds = array<i64: 1, 1, 1>, scalar_prefetch = 0 : i64, scratch_operands = 1 : i64, tpu.core_type = #tpu.core_type<tc>, window_params = [{transform_indices = @transform_0, window_bounds = array<i64: 16, 32>}, {transform_indices = @transform_1, window_bounds = array<i64: 32, 64>}, {transform_indices = @transform_2, window_bounds = array<i64: 1, 64>}, {transform_indices = @transform_3, window_bounds = array<i64: 16, 64>}]} {
    %c0_i32 = arith.constant 0 : i32
    %0 = arith.cmpi eq, %arg2, %c0_i32 : i32
    %1 = arith.extui %0 : i1 to i32
    %c0_i32_0 = arith.constant 0 : i32
    %2 = arith.cmpi ne, %1, %c0_i32_0 : i32
    scf.if %2 {
      %cst_10 = arith.constant 0.000000e+00 : f32
      %12 = vector.broadcast %cst_10 : f32 to vector<16x64xf32>
      %c0_11 = arith.constant 0 : index
      %c0_12 = arith.constant 0 : index
      %13 = vector.load %arg7[%c0_11, %c0_12] : memref<16x64xf32, #tpu.memory_space<vmem>>, vector<16x64xf32>
      tpu.vector_store %arg7[%c0_11, %c0_12], %12 {strides = array<i32>} : memref<16x64xf32, #tpu.memory_space<vmem>>, vector<16x64xf32>,
    } else {
    }
    %c0 = arith.constant 0 : index
    %c0_1 = arith.constant 0 : index
    %3 = vector.load %arg7[%c0, %c0_1] : memref<16x64xf32, #tpu.memory_space<vmem>>, vector<16x64xf32>
    %c0_2 = arith.constant 0 : index
    %c0_3 = arith.constant 0 : index
    %4 = vector.load %arg3[%c0_2, %c0_3] : memref<16x32xf32, #tpu.memory_space<vmem>>, vector<16x32xf32>
    %c0_4 = arith.constant 0 : index
    %c0_5 = arith.constant 0 : index
    %5 = vector.load %arg4[%c0_4, %c0_5] : memref<32x64xf32, #tpu.memory_space<vmem>>, vector<32x64xf32>
    %cst = arith.constant dense<0.000000e+00> : vector<16x64xf32>
    %6 = tpu.matmul %4, %5, %cst {dimension_numbers = #tpu.dot_dimension_numbers<[1], [0], [0], [1], [0, 0, 1, 1], [], []>} : vector<16x32xf32>, vector<32x64xf32>, vector<16x64xf32> -> vector<16x64xf32>
    %7 = arith.addf %3, %6 : vector<16x64xf32>
    %c0_6 = arith.constant 0 : index
    %c0_7 = arith.constant 0 : index
    %8 = vector.load %arg7[%c0_6, %c0_7] : memref<16x64xf32, #tpu.memory_space<vmem>>, vector<16x64xf32>
    tpu.vector_store %arg7[%c0_6, %c0_7], %7 {strides = array<i32>} : memref<16x64xf32, #tpu.memory_space<vmem>>, vector<16x64xf32>,
    %c0_i32_8 = arith.constant 0 : i32
    %9 = arith.cmpi eq, %arg2, %c0_i32_8 : i32
    %10 = arith.extui %9 : i1 to i32
    %c0_i32_9 = arith.constant 0 : i32
    %11 = arith.cmpi ne, %10, %c0_i32_9 : i32
    scf.if %11 {
      %c0_10 = arith.constant 0 : index
      %c0_11 = arith.constant 0 : index
      %12 = vector.load %arg7[%c0_10, %c0_11] : memref<16x64xf32, #tpu.memory_space<vmem>>, vector<16x64xf32>
      %c0_12 = arith.constant 0 : index
      %c0_13 = arith.constant 0 : index
      %13 = vector.load %arg5[%c0_12, %c0_13] : memref<1x64xf32, #tpu.memory_space<vmem>>, vector<1x64xf32>
      %14 = vector.broadcast %13 : vector<1x64xf32> to vector<16x64xf32>
      %15 = arith.addf %12, %14 : vector<16x64xf32>
      %cst_14 = arith.constant 5.000000e-01 : f32
      %16 = vector.broadcast %cst_14 : f32 to vector<16x64xf32>
      %17 = arith.mulf %16, %15 : vector<16x64xf32>
      %cst_15 = arith.constant 4.471500e-02 : f32
      %18 = vector.broadcast %cst_15 : f32 to vector<16x64xf32>
      %19 = arith.mulf %18, %15 : vector<16x64xf32>
      %20 = arith.mulf %19, %15 : vector<16x64xf32>
      %21 = arith.mulf %20, %15 : vector<16x64xf32>
      %22 = arith.addf %15, %21 : vector<16x64xf32>
      %cst_16 = arith.constant 0.797884583 : f32
      %23 = vector.broadcast %cst_16 : f32 to vector<16x64xf32>
      %24 = arith.mulf %23, %22 : vector<16x64xf32>
      %25 = math.tanh %24 : vector<16x64xf32>
      %cst_17 = arith.constant 1.000000e+00 : f32
      %26 = vector.broadcast %cst_17 : f32 to vector<16x64xf32>
      %27 = arith.addf %26, %25 : vector<16x64xf32>
      %28 = arith.mulf %17, %27 : vector<16x64xf32>
      %c0_18 = arith.constant 0 : index
      %c0_19 = arith.constant 0 : index
      %29 = vector.load %arg6[%c0_18, %c0_19] : memref<16x64xf32, #tpu.memory_space<vmem>>, vector<16x64xf32>
      tpu.vector_store %arg6[%c0_18, %c0_19], %28 {strides = array<i32>} : memref<16x64xf32, #tpu.memory_space<vmem>>, vector<16x64xf32>,
    } else {
    }
    return
  }
  func.func @transform_0(%arg0: i32, %arg1: i32, %arg2: i32) -> (i32, i32) {
    %c0_i32 = arith.constant 0 : i32
    return %arg0, %arg2 : i32, i32
  }
  func.func @transform_1(%arg0: i32, %arg1: i32, %arg2: i32) -> (i32, i32) {
    %c0_i32 = arith.constant 0 : i32
    return %arg2, %arg1 : i32, i32
  }
  func.func @transform_2(%arg0: i32, %arg1: i32, %arg2: i32) -> (i32, i32) {
    %c0_i32 = arith.constant 0 : i32
    %c0_i32_0 = arith.constant 0 : i32
    return %c0_i32, %arg1 : i32, i32
  }
  func.func @transform_3(%arg0: i32, %arg1: i32, %arg2: i32) -> (i32, i32) {
    %c0_i32 = arith.constant 0 : i32
    return %arg0, %arg1 : i32, i32
  }
}

module attributes {stable_mosaic.version = 11 : i64} {
  func.func @_add_layernorm_kernel(%arg0: i32, %arg1: memref<16x32xf32, #tpu.memory_space<vmem>>, %arg2: memref<16x32xf32, #tpu.memory_space<vmem>>, %arg3: memref<1x32xf32, #tpu.memory_space<vmem>>, %arg4: memref<1x32xf32, #tpu.memory_space<vmem>>, %arg5: memref<16x32xf32, #tpu.memory_space<vmem>>) attributes {dimension_semantics = [#tpu.dimension_semantics<parallel>], iteration_bounds = array<i64: 1>, scalar_prefetch = 0 : i64, scratch_operands = 0 : i64, tpu.core_type = #tpu.core_type<tc>, window_params = [{transform_indices = @transform_0, window_bounds = array<i64: 16, 32>}, {transform_indices = @transform_1, window_bounds = array<i64: 16, 32>}, {pipeline_mode = #tpu.pipeline_mode<synchronous>, transform_indices = @transform_2, window_bounds = array<i64: 1, 32>}, {pipeline_mode = #tpu.pipeline_mode<synchronous>, transform_indices = @transform_3, window_bounds = array<i64: 1, 32>}, {transform_indices = @transform_4, window_bounds = array<i64: 16, 32>}]} {
    %c0 = arith.constant 0 : index
    %c0_0 = arith.constant 0 : index
    %0 = vector.load %arg1[%c0, %c0_0] : memref<16x32xf32, #tpu.memory_space<vmem>>, vector<16x32xf32>
    %c0_1 = arith.constant 0 : index
    %c0_2 = arith.constant 0 : index
    %1 = vector.load %arg2[%c0_1, %c0_2] : memref<16x32xf32, #tpu.memory_space<vmem>>, vector<16x32xf32>
    %2 = arith.addf %0, %1 : vector<16x32xf32>
    %cst = arith.constant dense<0.000000e+00> : vector<16xf32>
    %3 = vector.multi_reduction <add>, %2, %cst [1] : vector<16x32xf32> to vector<16xf32>
    %4 = vector.shape_cast %3 : vector<16xf32> to vector<16x1xf32>
    %cst_3 = arith.constant 3.200000e+01 : f32
    %5 = vector.broadcast %cst_3 : f32 to vector<16x1xf32>
    %6 = arith.divf %4, %5 : vector<16x1xf32>
    %7 = vector.broadcast %6 : vector<16x1xf32> to vector<16x32xf32>
    %8 = arith.subf %2, %7 : vector<16x32xf32>
    %9 = arith.mulf %8, %8 : vector<16x32xf32>
    %cst_4 = arith.constant dense<0.000000e+00> : vector<16xf32>
    %10 = vector.multi_reduction <add>, %9, %cst_4 [1] : vector<16x32xf32> to vector<16xf32>
    %11 = vector.shape_cast %10 : vector<16xf32> to vector<16x1xf32>
    %cst_5 = arith.constant 3.200000e+01 : f32
    %12 = vector.broadcast %cst_5 : f32 to vector<16x1xf32>
    %13 = arith.divf %11, %12 : vector<16x1xf32>
    %cst_6 = arith.constant 1.000000e-03 : f32
    %14 = vector.broadcast %cst_6 : f32 to vector<16x1xf32>
    %15 = arith.addf %13, %14 : vector<16x1xf32>
    %16 = math.rsqrt %15 : vector<16x1xf32>
    %17 = vector.broadcast %16 : vector<16x1xf32> to vector<16x32xf32>
    %18 = arith.mulf %8, %17 : vector<16x32xf32>
    %c0_7 = arith.constant 0 : index
    %c0_8 = arith.constant 0 : index
    %19 = vector.load %arg3[%c0_7, %c0_8] : memref<1x32xf32, #tpu.memory_space<vmem>>, vector<1x32xf32>
    %20 = vector.broadcast %19 : vector<1x32xf32> to vector<16x32xf32>
    %21 = arith.mulf %18, %20 : vector<16x32xf32>
    %c0_9 = arith.constant 0 : index
    %c0_10 = arith.constant 0 : index
    %22 = vector.load %arg4[%c0_9, %c0_10] : memref<1x32xf32, #tpu.memory_space<vmem>>, vector<1x32xf32>
    %23 = vector.broadcast %22 : vector<1x32xf32> to vector<16x32xf32>
    %24 = arith.addf %21, %23 : vector<16x32xf32>
    %c0_11 = arith.constant 0 : index
    %c0_12 = arith.constant 0 : index
    %25 = vector.load %arg5[%c0_11, %c0_12] : memref<16x32xf32, #tpu.memory_space<vmem>>, vector<16x32xf32>
    tpu.vector_store %arg5[%c0_11, %c0_12], %24 {strides = array<i32>} : memref<16x32xf32, #tpu.memory_space<vmem>>, vector<16x32xf32>,
    return
  }
  func.func @transform_0(%arg0: i32) -> (i32, i32) {
    %c0_i32 = arith.constant 0 : i32
    %c0_i32_0 = arith.constant 0 : i32
    return %arg0, %c0_i32 : i32, i32
  }
  func.func @transform_1(%arg0: i32) -> (i32, i32) {
    %c0_i32 = arith.constant 0 : i32
    %c0_i32_0 = arith.constant 0 : i32
    return %arg0, %c0_i32 : i32, i32
  }
  func.func @transform_2(%arg0: i32) -> (i32, i32) {
    %c0_i32 = arith.constant 0 : i32
    %c0_i32_0 = arith.constant 0 : i32
    %c0_i32_1 = arith.constant 0 : i32
    return %c0_i32, %c0_i32_0 : i32, i32
  }
  func.func @transform_3(%arg0: i32) -> (i32, i32) {
    %c0_i32 = arith.constant 0 : i32
    %c0_i32_0 = arith.constant 0 : i32
    %c0_i32_1 = arith.constant 0 : i32
    return %c0_i32, %c0_i32_0 : i32, i32
  }
  func.func @transform_4(%arg0: i32) -> (i32, i32) {
    %c0_i32 = arith.constant 0 : i32
    %c0_i32_0 = arith.constant 0 : i32
    return %arg0, %c0_i32 : i32, i32
  }
}

module attributes {stable_mosaic.version = 11 : i64} {
  func.func @_linear_kernel(%arg0: i32, %arg1: i32, %arg2: i32, %arg3: memref<16x64xf32, #tpu.memory_space<vmem>>, %arg4: memref<64x32xf32, #tpu.memory_space<vmem>>, %arg5: memref<1x32xf32, #tpu.memory_space<vmem>>, %arg6: memref<16x32xf32, #tpu.memory_space<vmem>>, %arg7: memref<16x32xf32, #tpu.memory_space<vmem>>) attributes {dimension_semantics = [#tpu.dimension_semantics<parallel>, #tpu.dimension_semantics<parallel>, #tpu.dimension_semantics<arbitrary>], iteration_bounds = array<i64: 1, 1, 1>, scalar_prefetch = 0 : i64, scratch_operands = 1 : i64, tpu.core_type = #tpu.core_type<tc>, window_params = [{transform_indices = @transform_0, window_bounds = array<i64: 16, 64>}, {transform_indices = @transform_1, window_bounds = array<i64: 64, 32>}, {transform_indices = @transform_2, window_bounds = array<i64: 1, 32>}, {transform_indices = @transform_3, window_bounds = array<i64: 16, 32>}]} {
    %c0_i32 = arith.constant 0 : i32
    %0 = arith.cmpi eq, %arg2, %c0_i32 : i32
    %1 = arith.extui %0 : i1 to i32
    %c0_i32_0 = arith.constant 0 : i32
    %2 = arith.cmpi ne, %1, %c0_i32_0 : i32
    scf.if %2 {
      %cst_10 = arith.constant 0.000000e+00 : f32
      %12 = vector.broadcast %cst_10 : f32 to vector<16x32xf32>
      %c0_11 = arith.constant 0 : index
      %c0_12 = arith.constant 0 : index
      %13 = vector.load %arg7[%c0_11, %c0_12] : memref<16x32xf32, #tpu.memory_space<vmem>>, vector<16x32xf32>
      tpu.vector_store %arg7[%c0_11, %c0_12], %12 {strides = array<i32>} : memref<16x32xf32, #tpu.memory_space<vmem>>, vector<16x32xf32>,
    } else {
    }
    %c0 = arith.constant 0 : index
    %c0_1 = arith.constant 0 : index
    %3 = vector.load %arg7[%c0, %c0_1] : memref<16x32xf32, #tpu.memory_space<vmem>>, vector<16x32xf32>
    %c0_2 = arith.constant 0 : index
    %c0_3 = arith.constant 0 : index
    %4 = vector.load %arg3[%c0_2, %c0_3] : memref<16x64xf32, #tpu.memory_space<vmem>>, vector<16x64xf32>
    %c0_4 = arith.constant 0 : index
    %c0_5 = arith.constant 0 : index
    %5 = vector.load %arg4[%c0_4, %c0_5] : memref<64x32xf32, #tpu.memory_space<vmem>>, vector<64x32xf32>
    %cst = arith.constant dense<0.000000e+00> : vector<16x32xf32>
    %6 = tpu.matmul %4, %5, %cst {dimension_numbers = #tpu.dot_dimension_numbers<[1], [0], [0], [1], [0, 0, 1, 1], [], []>} : vector<16x64xf32>, vector<64x32xf32>, vector<16x32xf32> -> vector<16x32xf32>
    %7 = arith.addf %3, %6 : vector<16x32xf32>
    %c0_6 = arith.constant 0 : index
    %c0_7 = arith.constant 0 : index
    %8 = vector.load %arg7[%c0_6, %c0_7] : memref<16x32xf32, #tpu.memory_space<vmem>>, vector<16x32xf32>
    tpu.vector_store %arg7[%c0_6, %c0_7], %7 {strides = array<i32>} : memref<16x32xf32, #tpu.memory_space<vmem>>, vector<16x32xf32>,
    %c0_i32_8 = arith.constant 0 : i32
    %9 = arith.cmpi eq, %arg2, %c0_i32_8 : i32
    %10 = arith.extui %9 : i1 to i32
    %c0_i32_9 = arith.constant 0 : i32
    %11 = arith.cmpi ne, %10, %c0_i32_9 : i32
    scf.if %11 {
      %c0_10 = arith.constant 0 : index
      %c0_11 = arith.constant 0 : index
      %12 = vector.load %arg7[%c0_10, %c0_11] : memref<16x32xf32, #tpu.memory_space<vmem>>, vector<16x32xf32>
      %c0_12 = arith.constant 0 : index
      %c0_13 = arith.constant 0 : index
      %13 = vector.load %arg5[%c0_12, %c0_13] : memref<1x32xf32, #tpu.memory_space<vmem>>, vector<1x32xf32>
      %14 = vector.broadcast %13 : vector<1x32xf32> to vector<16x32xf32>
      %15 = arith.addf %12, %14 : vector<16x32xf32>
      %c0_14 = arith.constant 0 : index
      %c0_15 = arith.constant 0 : index
      %16 = vector.load %arg6[%c0_14, %c0_15] : memref<16x32xf32, #tpu.memory_space<vmem>>, vector<16x32xf32>
      tpu.vector_store %arg6[%c0_14, %c0_15], %15 {strides = array<i32>} : memref<16x32xf32, #tpu.memory_space<vmem>>, vector<16x32xf32>,
    } else {
    }
    return
  }
  func.func @transform_0(%arg0: i32, %arg1: i32, %arg2: i32) -> (i32, i32) {
    %c0_i32 = arith.constant 0 : i32
    return %arg0, %arg2 : i32, i32
  }
  func.func @transform_1(%arg0: i32, %arg1: i32, %arg2: i32) -> (i32, i32) {
    %c0_i32 = arith.constant 0 : i32
    return %arg2, %arg1 : i32, i32
  }
  func.func @transform_2(%arg0: i32, %arg1: i32, %arg2: i32) -> (i32, i32) {
    %c0_i32 = arith.constant 0 : i32
    %c0_i32_0 = arith.constant 0 : i32
    return %c0_i32, %arg1 : i32, i32
  }
  func.func @transform_3(%arg0: i32, %arg1: i32, %arg2: i32) -> (i32, i32) {
    %c0_i32 = arith.constant 0 : i32
    return %arg0, %arg1 : i32, i32
  }
}

</mosaic_0001>

<llo_original>
// kernel: transformer_encoder_layer_forward.10
$region0: #{transformer_encoder_layer_forward.10}
  #allocation0 [shape = 'u32[]', space=smem, size = 0x4, offset = 0x4, fixed_abs, tag = 'smem constant byte address 0x4 - core index']
  #allocation1 [shape = 'u32[144,128]{1,0:T(1,128)}', space=vmem, size = 0x12000, scoped, tag = 'internal scratch']
  #allocation2 [shape = 'f32[16,32]{1,0:T(8,128)}', space=vmem, size = 0x2000, scoped, tag = 'scratch operand']
  %s0 = inlined_call_operand.vmem [shape: f32[16,32], index: 0, kind: input, shape index: {}]
  %s1 = inlined_call_operand.vmem [shape: f32[32,32], index: 1, kind: input, shape index: {}]
  %s2 = inlined_call_operand.vmem [shape: f32[1,32], index: 2, kind: input, shape index: {}]
  %s3 = inlined_call_operand.vmem [shape: f32[16,32], index: 3, kind: output, shape index: {}]
  %s4 = sld [smem:[#allocation0]]
  $region30: #{transformer_encoder_layer_forward.10} parent=0
    _
  %s6 = ssub.s32 1, %s4
  %s7 = scalar_select 0, %s6, %s4
  // Predicated region
  $region2: #{transformer_encoder_layer_forward.10} parent=0 // pred_check
    _
  $region3: #{transformer_encoder_layer_forward.10} parent=0 // pred_check_branch
    %9 = sbr.rel (0) target = $region5
  $region4: #{transformer_encoder_layer_forward.10} parent=0 // pred_region
    _
  $region5: #{transformer_encoder_layer_forward.10} parent=0 // pred_fallthru
    _
  // Predicated region
  $region6: #{transformer_encoder_layer_forward.10} parent=0 // pred_check
    _
  $region7: #{transformer_encoder_layer_forward.10} parent=0 // pred_check_branch
    %11 = sbr.rel (0) target = $region9
  $region8: #{transformer_encoder_layer_forward.10} parent=0 // pred_region
    _
  $region9: #{transformer_encoder_layer_forward.10} parent=0 // pred_fallthru
    _
  // Predicated region
  $region10: #{transformer_encoder_layer_forward.10} parent=0 // pred_check
    _
  $region11: #{transformer_encoder_layer_forward.10} parent=0 // pred_check_branch
    %13 = sbr.rel (0) target = $region13
  $region12: #{transformer_encoder_layer_forward.10} parent=0 // pred_region
    _
  $region13: #{transformer_encoder_layer_forward.10} parent=0 // pred_fallthru
    _
  %p14 = scmp.eq.s32.totalorder 0, 0
  // Predicated region
  $region14: #{transformer_encoder_layer_forward.10} parent=0 // pred_check
    %p15 = pneg %p14
  $region15: #{transformer_encoder_layer_forward.10} parent=0 // pred_check_branch
    %17 = sbr.rel (%p15) target = $region17
  $region16: #{transformer_encoder_layer_forward.10} parent=0 // pred_region
    %vm18 = vcmask 261120
    %19 = vst.msk [vmem:[#allocation2] sm:$0xff] %vm18, 0.0
    %20 = vst.msk [vmem:[#allocation2 + $0x8] sm:$0xff] %vm18, 0.0
  $region17: #{transformer_encoder_layer_forward.10} parent=0 // pred_fallthru
    _
  %v21 = vld [vmem:[#allocation2] sm:$0xff]
  %v22 = vld [vmem:[#allocation2 + $0x8] sm:$0xff]
  %v23 = vld [vmem:[%s0] sm:$0xff]
  %v24 = vld [vmem:[%s0 + $0x8] sm:$0xff]
  %v25 = vld [vmem:[%s1] sm:$0xff]
  %v26 = vld [vmem:[%s1 + $0x8] sm:$0xff]
  %v27 = vld [vmem:[%s1 + $0x10] sm:$0xff]
  %v28 = vld [vmem:[%s1 + $0x18] sm:$0xff]
  %vm29 = vcmask 261120
  %v31 = vsel %vm29, %v23, 0
  %v34 = vsel %vm29, %v24, 0
  %36 = vmatprep.subr.mxu0 0.0
  %37 = vmatpush1.msra.mxu0 %v25
  %38 = vmatprep.subr.mxu0 0.0
  %39 = vmatpush1.msra.mxu0 %v26
  %40 = vmatprep.subr.mxu0 0.0
  %41 = vmatpush1.msra.mxu0 %v27
  %42 = vmatprep.subr.mxu0 0.0
  %43 = vmatpush1.msra.mxu0 %v28
  %44 = vmatprep.subr.mxu0 0.0
  %45 = vmatpush1.msra.mxu0 0.0
  %46 = vmatprep.subr.mxu0 0.0
  %47 = vmatpush1.msra.mxu0 0.0
  %48 = vmatprep.subr.mxu0 0.0
  %49 = vmatpush1.msra.mxu0 0.0
  %50 = vmatprep.subr.mxu0 0.0
  %51 = vmatpush1.msra.mxu0 0.0
  %52 = vmatprep.subr.mxu0 0.0
  %53 = vmatpush1.msra.mxu0 0.0
  %54 = vmatprep.subr.mxu0 0.0
  %55 = vmatpush1.msra.mxu0 0.0
  %56 = vmatprep.subr.mxu0 0.0
  %57 = vmatpush1.msra.mxu0 0.0
  %58 = vmatprep.subr.mxu0 0.0
  %59 = vmatpush1.msra.mxu0 0.0
  %60 = vmatprep.subr.mxu0 0.0
  %61 = vmatpush1.msra.mxu0 0.0
  %62 = vmatprep.subr.mxu0 0.0
  %63 = vmatpush1.msra.mxu0 0.0
  %64 = vmatprep.subr.mxu0 0.0
  %65 = vmatpush1.msra.mxu0 0.0
  %66 = vmatprep.subr.mxu0 0.0
  %67 = vmatpush1.msra.mxu0 0.0
  %68 = vmatprep.subr.mxu0 0.0
  %69 = vmatpush1.msra.mxu0 0.0
  %70 = vmatprep.subr.mxu0 0.0
  %71 = vmatpush1.msra.mxu0 0.0
  %72 = vmatprep.subr.mxu0 0.0
  %73 = vmatpush1.msra.mxu0 0.0
  %74 = vmatprep.subr.mxu0 0.0
  %75 = vmatpush1.msra.mxu0 0.0
  %76 = vmatprep.subr.mxu0 0.0
  %77 = vmatpush1.msra.mxu0 0.0
  %78 = vmatprep.subr.mxu0 0.0
  %79 = vmatpush1.msra.mxu0 0.0
  %80 = vmatprep.subr.mxu0 0.0
  %81 = vmatpush1.msra.mxu0 0.0
  %82 = vmatprep.subr.mxu0 0.0
  %83 = vmatpush1.msra.mxu0 0.0
  %84 = vmatprep.subr.mxu0 0.0
  %85 = vmatpush1.msra.mxu0 0.0
  %86 = vmatprep.subr.mxu0 0.0
  %87 = vmatpush1.msra.mxu0 0.0
  %88 = vmatprep.subr.mxu0 0.0
  %89 = vmatpush1.msra.mxu0 0.0
  %90 = vmatprep.subr.mxu0 0.0
  %91 = vmatpush1.msra.mxu0 0.0
  %92 = vmatprep.subr.mxu0 0.0
  %93 = vmatpush1.msra.mxu0 0.0
  %94 = vmatprep.subr.mxu0 0.0
  %95 = vmatpush1.msra.mxu0 0.0
  %96 = vmatprep.subr.mxu0 0.0
  %97 = vmatpush1.msra.mxu0 0.0
  %98 = vmatprep.subr.mxu0 0.0
  %99 = vmatpush1.msra.mxu0 0.0
  %100 = vmatprep.mubr.f32.mxu0 0.0
  %101 = vmatmul.mubr.f32.gmra.mrb[0].mxu0 %v31
  %v102 = vpop.f32.mrb[0].mxu0
  %v103 = vadd.f32 0.0, %v102
  %v104 = vpop.f32.mrb[0].mxu0
  %105 = vmatprep.mubr.f32.mxu0 0.0
  %106 = vmatmul.mubr.f32.gmra.mrb[0].mxu0 %v34
  %v107 = vpop.f32.mrb[0].mxu0
  %v108 = vadd.f32 0.0, %v107
  %v109 = vpop.f32.mrb[0].mxu0
  %110 = vdwg.mxu0
  %v111 = vadd.f32 %v21, %v103
  %v112 = vadd.f32 %v22, %v108
  %113 = vst.msk [vmem:[#allocation2] sm:$0xff] %vm29, %v111
  %114 = vst.msk [vmem:[#allocation2 + $0x8] sm:$0xff] %vm29, %v112
  // Predicated region
  $region18: #{transformer_encoder_layer_forward.10} parent=0 // pred_check
    %p115 = pneg %p14
  $region19: #{transformer_encoder_layer_forward.10} parent=0 // pred_check_branch
    %117 = sbr.rel (%p115) target = $region21
  $region20: #{transformer_encoder_layer_forward.10} parent=0 // pred_region
    %v118 = vld [vmem:[#allocation2] sm:$0xff]
    %v119 = vld [vmem:[#allocation2 + $0x8] sm:$0xff]
    %v120 = vld [vmem:[%s2] sm:$0x1]
    %v122 = vlaneseq
    %v123 = vshrl.u32 %v122, 7
    %v124 = vsub.s32 0, %v123
    %v125 = vrot.slane %v120, %v124
    %v127 = vadd.f32 %v118, %v125
    %v128 = vadd.f32 %v119, %v125
    %129 = vst.msk [vmem:[%s3] sm:$0xff] %vm29, %v127
    %130 = vst.msk [vmem:[%s3 + $0x8] sm:$0xff] %vm29, %v128
  $region21: #{transformer_encoder_layer_forward.10} parent=0 // pred_fallthru
    _
  // Predicated region
  $region22: #{transformer_encoder_layer_forward.10} parent=0 // pred_check
    _
  $region23: #{transformer_encoder_layer_forward.10} parent=0 // pred_check_branch
    %132 = sbr.rel (0) target = $region25
  $region24: #{transformer_encoder_layer_forward.10} parent=0 // pred_region
    _
  $region25: #{transformer_encoder_layer_forward.10} parent=0 // pred_fallthru
    _
  // Predicated region
  $region26: #{transformer_encoder_layer_forward.10} parent=0 // pred_check
    _
  $region27: #{transformer_encoder_layer_forward.10} parent=0 // pred_check_branch
    %134 = sbr.rel (0) target = $region29
  $region28: #{transformer_encoder_layer_forward.10} parent=0 // pred_region
    _
  $region29: #{transformer_encoder_layer_forward.10} parent=0 // pred_fallthru
    _

// kernel: transformer_encoder_layer_forward.14
$region0: #{transformer_encoder_layer_forward.14}
  #allocation0 [shape = 'u32[]', space=smem, size = 0x4, offset = 0x4, fixed_abs, tag = 'smem constant byte address 0x4 - core index']
  #allocation1 [shape = 'u32[144,128]{1,0:T(1,128)}', space=vmem, size = 0x12000, scoped, tag = 'internal scratch']
  %s0 = inlined_call_operand.vmem [shape: f32[16,32], index: 0, kind: input, shape index: {}]
  %s1 = inlined_call_operand.vmem [shape: f32[16,32], index: 1, kind: input, shape index: {}]
  %s2 = inlined_call_operand.vmem [shape: f32[1,32], index: 2, kind: input, shape index: {}]
  %s3 = inlined_call_operand.vmem [shape: f32[1,32], index: 3, kind: input, shape index: {}]
  %s4 = inlined_call_operand.vmem [shape: f32[16,32], index: 4, kind: output, shape index: {}]
  %s5 = sld [smem:[#allocation0]]
  $region26: #{transformer_encoder_layer_forward.14} parent=0
    _
  %s7 = ssub.s32 1, %s5
  %s8 = scalar_select 0, %s7, %s5
  // Predicated region
  $region2: #{transformer_encoder_layer_forward.14} parent=0 // pred_check
    _
  $region3: #{transformer_encoder_layer_forward.14} parent=0 // pred_check_branch
    %10 = sbr.rel (0) target = $region5
  $region4: #{transformer_encoder_layer_forward.14} parent=0 // pred_region
    _
  $region5: #{transformer_encoder_layer_forward.14} parent=0 // pred_fallthru
    _
  // Predicated region
  $region6: #{transformer_encoder_layer_forward.14} parent=0 // pred_check
    _
  $region7: #{transformer_encoder_layer_forward.14} parent=0 // pred_check_branch
    %12 = sbr.rel (0) target = $region9
  $region8: #{transformer_encoder_layer_forward.14} parent=0 // pred_region
    _
  $region9: #{transformer_encoder_layer_forward.14} parent=0 // pred_fallthru
    _
  // Predicated region
  $region10: #{transformer_encoder_layer_forward.14} parent=0 // pred_check
    _
  $region11: #{transformer_encoder_layer_forward.14} parent=0 // pred_check_branch
    %14 = sbr.rel (0) target = $region13
  $region12: #{transformer_encoder_layer_forward.14} parent=0 // pred_region
    _
  $region13: #{transformer_encoder_layer_forward.14} parent=0 // pred_fallthru
    _
  // Predicated region
  $region14: #{transformer_encoder_layer_forward.14} parent=0 // pred_check
    _
  $region15: #{transformer_encoder_layer_forward.14} parent=0 // pred_check_branch
    %16 = sbr.rel (0) target = $region17
  $region16: #{transformer_encoder_layer_forward.14} parent=0 // pred_region
    _
  $region17: #{transformer_encoder_layer_forward.14} parent=0 // pred_fallthru
    _
  %v17 = vld [vmem:[%s0] sm:$0xff]
  %v18 = vld [vmem:[%s0 + $0x8] sm:$0xff]
  %v19 = vld [vmem:[%s1] sm:$0xff]
  %v20 = vld [vmem:[%s1 + $0x8] sm:$0xff]
  %v21 = vadd.f32 %v17, %v19
  %v22 = vadd.f32 %v18, %v20
  %vm23 = vcmask 261120
  %v24 = vsel %vm23, %v21, 0.0
  %25 = vadd.xlane.f32.xlu0 %v24
  %v26 = vpop.xlane.xlu0 %25
  %v27 = vsel %vm23, %v22, 0.0
  %28 = vadd.xlane.f32.xlu0 %v27
  %v29 = vpop.xlane.xlu0 %28
  %v30 = vrcp.pop 32.0
  %v31 = vmul.f32 %v26, %v30
  %v32 = vmul.f32 %v29, %v30
  %v33 = vsub.f32 %v21, %v31
  %v34 = vsub.f32 %v22, %v32
  %v35 = vmul.f32 %v33, %v33
  %v36 = vmul.f32 %v34, %v34
  %v37 = vsel %vm23, %v35, 0.0
  %38 = vadd.xlane.f32.xlu0 %v37
  %v39 = vpop.xlane.xlu0 %38
  %v40 = vsel %vm23, %v36, 0.0
  %41 = vadd.xlane.f32.xlu0 %v40
  %v42 = vpop.xlane.xlu0 %41
  %v43 = vmul.f32 %v39, %v30
  %v44 = vmul.f32 %v42, %v30
  %v45 = vadd.f32 %v43, 0.001
  %v46 = vadd.f32 %v44, 0.001
  %v47 = vrsqrt.pop %v45
  %v48 = vrsqrt.pop %v46
  %v49 = vmul.f32 %v33, %v47
  %v50 = vmul.f32 %v34, %v48
  %v51 = vld [vmem:[%s2] sm:$0x1]
  %v53 = vlaneseq
  %v54 = vshrl.u32 %v53, 7
  %v55 = vsub.s32 0, %v54
  %v56 = vrot.slane %v51, %v55
  %v58 = vmul.f32 %v49, %v56
  %v59 = vmul.f32 %v50, %v56
  %v60 = vld [vmem:[%s3] sm:$0x1]
  %v62 = vlaneseq
  %v63 = vshrl.u32 %v62, 7
  %v64 = vsub.s32 0, %v63
  %v65 = vrot.slane %v60, %v64
  %v67 = vadd.f32 %v58, %v65
  %v68 = vadd.f32 %v59, %v65
  %69 = vst.msk [vmem:[%s4] sm:$0xff] %vm23, %v67
  %70 = vst.msk [vmem:[%s4 + $0x8] sm:$0xff] %vm23, %v68
  // Predicated region
  $region18: #{transformer_encoder_layer_forward.14} parent=0 // pred_check
    _
  $region19: #{transformer_encoder_layer_forward.14} parent=0 // pred_check_branch
    %72 = sbr.rel (0) target = $region21
  $region20: #{transformer_encoder_layer_forward.14} parent=0 // pred_region
    _
  $region21: #{transformer_encoder_layer_forward.14} parent=0 // pred_fallthru
    _
  // Predicated region
  $region22: #{transformer_encoder_layer_forward.14} parent=0 // pred_check
    _
  $region23: #{transformer_encoder_layer_forward.14} parent=0 // pred_check_branch
    %74 = sbr.rel (0) target = $region25
  $region24: #{transformer_encoder_layer_forward.14} parent=0 // pred_region
    _
  $region25: #{transformer_encoder_layer_forward.14} parent=0 // pred_fallthru
    _

// kernel: transformer_encoder_layer_forward.12
$region0: #{transformer_encoder_layer_forward.12}
  #allocation0 [shape = 'u32[]', space=smem, size = 0x4, offset = 0x4, fixed_abs, tag = 'smem constant byte address 0x4 - core index']
  #allocation1 [shape = 'u32[144,128]{1,0:T(1,128)}', space=vmem, size = 0x12000, scoped, tag = 'internal scratch']
  %s0 = inlined_call_operand.vmem [shape: f32[2,4,8,8], index: 0, kind: input, shape index: {}]
  %s1 = inlined_call_operand.vmem [shape: f32[2,4,8,8], index: 1, kind: input, shape index: {}]
  %s2 = inlined_call_operand.vmem [shape: f32[2,4,8,8], index: 2, kind: input, shape index: {}]
  %s3 = inlined_call_operand.vmem [shape: f32[2,1,8], index: 3, kind: input, shape index: {}]
  %s4 = inlined_call_operand.vmem [shape: f32[2,4,8,8], index: 4, kind: output, shape index: {}]
  %s5 = sld [smem:[#allocation0]]
  $region49: #{transformer_encoder_layer_forward.12} parent=0
    _
  %s7 = ssub.s32 1, %s5
  %s8 = scalar_select 0, %s7, %s5
  loop: start=0, step=1, limit=10
  $region2: #{transformer_encoder_layer_forward.12} parent=0 // loop_pre_header
    _
  $region3: #{transformer_encoder_layer_forward.12} parent=0 // loop_header
    %s10 = sphi 0, %s14
    %p11 = scmp.ge.s32.totalorder %s10, 10
    %s17 = sphi 0, %s29
    %s18 = sphi 0, %s25
    %s19 = sphi 0, %s17
    %s20 = sphi 0, %s18
    %s21 = sphi 0, %s19
    %s22 = sphi 0, %s20
    %s34 = sphi 0, %s36
    %s37 = sphi 0, %s34
    %s38 = sphi 0, %s37
    %s54 = sphi 0, %s38
    %s62 = sphi 0, %s64
    %s65 = sphi 0, %s62
    %s66 = sphi 0, %s65
    %s82 = sphi 0, %s66
    %s90 = sphi 0, %s92
    %s93 = sphi 0, %s90
    %s94 = sphi 0, %s93
    %s110 = sphi 0, %s94
    %s116 = sphi 0, %s118
    %s119 = sphi 0, %s116
    %s120 = sphi 0, %s119
    %s136 = sphi 0, %s120
    %s144 = sphi 0, %s146
    %s147 = sphi 0, %s144
    %s148 = sphi 0, %s147
    %s164 = sphi 0, %s148
  $region4: #{transformer_encoder_layer_forward.12} parent=0 // loop_header_branch
    %13 = sbr.rel (%p11) target = $region8
  $region5: #{transformer_encoder_layer_forward.12} parent=0 // loop_body
    %s15 = ssub.s32 %s10, 1
    %s16 = ssub.s32 %s10, 2
    %s23 = sadd.s32 1, %s18
    %p24 = scmp.ge.s32.totalorder %s23, 4
    %s25 = scalar_select %p24, 0, %s23
    %s26 = sadd.s32 1, %s17
    %s27 = scalar_select %p24, %s26, %s17
    %p28 = scmp.ge.s32.totalorder %s27, 2
    %s29 = scalar_select %p28, 0, %s27
    %s30 = ssub.s32 %s17, %s29
    %s31 = ssub.s32 %s18, %s25
    %s32 = sor.u32 %s30, %s31
    %p33 = scmp.eq.s32.totalorder %s32, 0
    %s35 = sadd.s32 %s34, 1
    %s36 = scalar_select %p33, %s34, %s35
    %p39 = pneg %p33
    %p40 = scmp.eq.s32.totalorder %s10, 7
    %p41 = por %p39, %p40
    %p42 = scmp.ne.s32.totalorder %s34, %s37
    %p43 = scmp.eq.s32.totalorder %s10, 0
    %p44 = por %p42, %p43
    %p45 = scmp.ne.s32.totalorder %s34, %s37
    %p46 = scmp.eq.s32.totalorder %s15, 7
    %p47 = por %p45, %p46
    %p48 = scmp.ne.s32.totalorder %s37, %s38
    %p49 = scmp.eq.s32.totalorder %s15, 0
    %p50 = por %p48, %p49
    %p51 = scmp.ne.s32.totalorder %s37, %s38
    %p52 = scmp.eq.s32.totalorder %s16, 7
    %p53 = por %p51, %p52
    %p55 = scmp.ne.s32.totalorder %s38, %s54
    %p56 = scmp.eq.s32.totalorder %s16, 0
    %p57 = por %p55, %p56
    %s58 = ssub.s32 %s17, %s29
    %s59 = ssub.s32 %s18, %s25
    %s60 = sor.u32 %s58, %s59
    %p61 = scmp.eq.s32.totalorder %s60, 0
    %s63 = sadd.s32 %s62, 1
    %s64 = scalar_select %p61, %s62, %s63
    %p67 = pneg %p61
    %p68 = scmp.eq.s32.totalorder %s10, 7
    %p69 = por %p67, %p68
    %p70 = scmp.ne.s32.totalorder %s62, %s65
    %p71 = scmp.eq.s32.totalorder %s10, 0
    %p72 = por %p70, %p71
    %p73 = scmp.ne.s32.totalorder %s62, %s65
    %p74 = scmp.eq.s32.totalorder %s15, 7
    %p75 = por %p73, %p74
    %p76 = scmp.ne.s32.totalorder %s65, %s66
    %p77 = scmp.eq.s32.totalorder %s15, 0
    %p78 = por %p76, %p77
    %p79 = scmp.ne.s32.totalorder %s65, %s66
    %p80 = scmp.eq.s32.totalorder %s16, 7
    %p81 = por %p79, %p80
    %p83 = scmp.ne.s32.totalorder %s66, %s82
    %p84 = scmp.eq.s32.totalorder %s16, 0
    %p85 = por %p83, %p84
    %s86 = ssub.s32 %s17, %s29
    %s87 = ssub.s32 %s18, %s25
    %s88 = sor.u32 %s86, %s87
    %p89 = scmp.eq.s32.totalorder %s88, 0
    %s91 = sadd.s32 %s90, 1
    %s92 = scalar_select %p89, %s90, %s91
    %p95 = pneg %p89
    %p96 = scmp.eq.s32.totalorder %s10, 7
    %p97 = por %p95, %p96
    %p98 = scmp.ne.s32.totalorder %s90, %s93
    %p99 = scmp.eq.s32.totalorder %s10, 0
    %p100 = por %p98, %p99
    %p101 = scmp.ne.s32.totalorder %s90, %s93
    %p102 = scmp.eq.s32.totalorder %s15, 7
    %p103 = por %p101, %p102
    %p104 = scmp.ne.s32.totalorder %s93, %s94
    %p105 = scmp.eq.s32.totalorder %s15, 0
    %p106 = por %p104, %p105
    %p107 = scmp.ne.s32.totalorder %s93, %s94
    %p108 = scmp.eq.s32.totalorder %s16, 7
    %p109 = por %p107, %p108
    %p111 = scmp.ne.s32.totalorder %s94, %s110
    %p112 = scmp.eq.s32.totalorder %s16, 0
    %p113 = por %p111, %p112
    %s114 = ssub.s32 %s17, %s29
    %p115 = scmp.eq.s32.totalorder %s114, 0
    %s117 = sadd.s32 %s116, 1
    %s118 = scalar_select %p115, %s116, %s117
    %p121 = pneg %p115
    %p122 = scmp.eq.s32.totalorder %s10, 7
    %p123 = por %p121, %p122
    %p124 = scmp.ne.s32.totalorder %s116, %s119
    %p125 = scmp.eq.s32.totalorder %s10, 0
    %p126 = por %p124, %p125
    %p127 = scmp.ne.s32.totalorder %s116, %s119
    %p128 = scmp.eq.s32.totalorder %s15, 7
    %p129 = por %p127, %p128
    %p130 = scmp.ne.s32.totalorder %s119, %s120
    %p131 = scmp.eq.s32.totalorder %s15, 0
    %p132 = por %p130, %p131
    %p133 = scmp.ne.s32.totalorder %s119, %s120
    %p134 = scmp.eq.s32.totalorder %s16, 7
    %p135 = por %p133, %p134
    %p137 = scmp.ne.s32.totalorder %s120, %s136
    %p138 = scmp.eq.s32.totalorder %s16, 0
    %p139 = por %p137, %p138
    %s140 = ssub.s32 %s17, %s29
    %s141 = ssub.s32 %s18, %s25
    %s142 = sor.u32 %s140, %s141
    %p143 = scmp.eq.s32.totalorder %s142, 0
    %s145 = sadd.s32 %s144, 1
    %s146 = scalar_select %p143, %s144, %s145
    %p149 = pneg %p143
    %p150 = scmp.eq.s32.totalorder %s10, 7
    %p151 = por %p149, %p150
    %p152 = scmp.ne.s32.totalorder %s144, %s147
    %p153 = scmp.eq.s32.totalorder %s10, 0
    %p154 = por %p152, %p153
    %p155 = scmp.ne.s32.totalorder %s144, %s147
    %p156 = scmp.eq.s32.totalorder %s15, 7
    %p157 = por %p155, %p156
    %p158 = scmp.ne.s32.totalorder %s147, %s148
    %p159 = scmp.eq.s32.totalorder %s15, 0
    %p160 = por %p158, %p159
    %p161 = scmp.ne.s32.totalorder %s147, %s148
    %p162 = scmp.eq.s32.totalorder %s16, 7
    %p163 = por %p161, %p162
    %p165 = scmp.ne.s32.totalorder %s148, %s164
    %p166 = scmp.eq.s32.totalorder %s16, 0
    %p167 = por %p165, %p166
    %p168 = scmp.le.s32.totalorder 1, %s10
    %p169 = scmp.lt.s32.totalorder %s10, 9
    %p170 = pnand %p168, %p169
    %p171 = pneg %p170
    // Predicated region
    $region9: #{transformer_encoder_layer_forward.12} parent=5 // pred_check
      _
    $region10: #{transformer_encoder_layer_forward.12} parent=5 // pred_check_branch
      %173 = sbr.rel (%p170) target = $region12
    $region11: #{transformer_encoder_layer_forward.12} parent=5 // pred_region
      %s174 = ssub.s32 %s10, 1
    $region12: #{transformer_encoder_layer_forward.12} parent=5 // pred_fallthru
      _
    %p175 = scmp.lt.s32.totalorder %s10, 8
    // Predicated region
    $region13: #{transformer_encoder_layer_forward.12} parent=5 // pred_check
      %p176 = pneg %p175
    $region14: #{transformer_encoder_layer_forward.12} parent=5 // pred_check_branch
      %178 = sbr.rel (%p176) target = $region16
    $region15: #{transformer_encoder_layer_forward.12} parent=5 // pred_region
      // Predicated region
      $region17: #{transformer_encoder_layer_forward.12} parent=15 // pred_check
        %p179 = pneg %p44
      $region18: #{transformer_encoder_layer_forward.12} parent=15 // pred_check_branch
        %181 = sbr.rel (%p179) target = $region20
      $region19: #{transformer_encoder_layer_forward.12} parent=15 // pred_region
        %p182 = scmp.lt.s32.totalorder %s17, 1
        %s183 = scalar_select %p182, %s17, 1
        %p184 = scmp.lt.s32.totalorder %s18, 3
        %s185 = scalar_select %p184, %s18, 3
        %s186 = smul.addr %s183, 4
        %s187 = sadd.s32 %s185, %s186
        %s188 = smul.addr %s187, 8
        %s189 = scalar_lea.vmem %s0, %s188
      $region20: #{transformer_encoder_layer_forward.12} parent=15 // pred_fallthru
        _
      // Predicated region
      $region21: #{transformer_encoder_layer_forward.12} parent=15 // pred_check
        %p190 = pneg %p72
      $region22: #{transformer_encoder_layer_forward.12} parent=15 // pred_check_branch
        %192 = sbr.rel (%p190) target = $region24
      $region23: #{transformer_encoder_layer_forward.12} parent=15 // pred_region
        %p193 = scmp.lt.s32.totalorder %s17, 1
        %s194 = scalar_select %p193, %s17, 1
        %p195 = scmp.lt.s32.totalorder %s18, 3
        %s196 = scalar_select %p195, %s18, 3
        %s197 = smul.addr %s194, 4
        %s198 = sadd.s32 %s196, %s197
        %s199 = smul.addr %s198, 8
        %s200 = scalar_lea.vmem %s1, %s199
      $region24: #{transformer_encoder_layer_forward.12} parent=15 // pred_fallthru
        _
      // Predicated region
      $region25: #{transformer_encoder_layer_forward.12} parent=15 // pred_check
        %p201 = pneg %p100
      $region26: #{transformer_encoder_layer_forward.12} parent=15 // pred_check_branch
        %203 = sbr.rel (%p201) target = $region28
      $region27: #{transformer_encoder_layer_forward.12} parent=15 // pred_region
        %p204 = scmp.lt.s32.totalorder %s17, 1
        %s205 = scalar_select %p204, %s17, 1
        %p206 = scmp.lt.s32.totalorder %s18, 3
        %s207 = scalar_select %p206, %s18, 3
        %s208 = smul.addr %s205, 4
        %s209 = sadd.s32 %s207, %s208
        %s210 = smul.addr %s209, 8
        %s211 = scalar_lea.vmem %s2, %s210
      $region28: #{transformer_encoder_layer_forward.12} parent=15 // pred_fallthru
        _
      // Predicated region
      $region29: #{transformer_encoder_layer_forward.12} parent=15 // pred_check
        %p212 = pneg %p126
      $region30: #{transformer_encoder_layer_forward.12} parent=15 // pred_check_branch
        %214 = sbr.rel (%p212) target = $region32
      $region31: #{transformer_encoder_layer_forward.12} parent=15 // pred_region
        %p215 = scmp.lt.s32.totalorder %s17, 1
        %s216 = scalar_select %p215, %s17, 1
        %s217 = scalar_lea.vmem %s3, %s216
      $region32: #{transformer_encoder_layer_forward.12} parent=15 // pred_fallthru
        _
    $region16: #{transformer_encoder_layer_forward.12} parent=5 // pred_fallthru
      _
    %p218 = scmp.le.s32.totalorder 1, %s10
    %p219 = scmp.lt.s32.totalorder %s10, 9
    %p220 = pnand %p218, %p219
    %p221 = pneg %p220
    // Predicated region
    $region33: #{transformer_encoder_layer_forward.12} parent=5 // pred_check
      _
    $region34: #{transformer_encoder_layer_forward.12} parent=5 // pred_check_branch
      %223 = sbr.rel (%p220) target = $region36
    $region35: #{transformer_encoder_layer_forward.12} parent=5 // pred_region
      %s224 = ssub.s32 %s10, 1
      %p225 = scmp.lt.s32.totalorder %s19, 1
      %s226 = scalar_select %p225, %s19, 1
      %p227 = scmp.lt.s32.totalorder %s20, 3
      %s228 = scalar_select %p227, %s20, 3
      %s229 = smul.addr %s226, 4
      %s230 = sadd.s32 %s228, %s229
      %s231 = smul.addr %s230, 8
      %s232 = scalar_lea.vmem %s0, %s231
      %p233 = pneg %p50
      %p234 = pneg %p47
      %p235 = scmp.lt.s32.totalorder %s19, 1
      %s236 = scalar_select %p235, %s19, 1
      %p237 = scmp.lt.s32.totalorder %s20, 3
      %s238 = scalar_select %p237, %s20, 3
      %s239 = smul.addr %s236, 4
      %s240 = sadd.s32 %s238, %s239
      %s241 = smul.addr %s240, 8
      %s242 = scalar_lea.vmem %s1, %s241
      %p243 = pneg %p78
      %p244 = pneg %p75
      %p245 = scmp.lt.s32.totalorder %s19, 1
      %s246 = scalar_select %p245, %s19, 1
      %p247 = scmp.lt.s32.totalorder %s20, 3
      %s248 = scalar_select %p247, %s20, 3
      %s249 = smul.addr %s246, 4
      %s250 = sadd.s32 %s248, %s249
      %s251 = smul.addr %s250, 8
      %s252 = scalar_lea.vmem %s2, %s251
      %p253 = pneg %p106
      %p254 = pneg %p103
      %p255 = scmp.lt.s32.totalorder %s19, 1
      %s256 = scalar_select %p255, %s19, 1
      %s257 = scalar_lea.vmem %s3, %s256
      %p258 = pneg %p132
      %p259 = pneg %p129
      %p260 = pneg %p160
      %p261 = pneg %p157
      %p262 = scmp.lt.s32.totalorder %s19, 1
      %s263 = scalar_select %p262, %s19, 1
      %p264 = scmp.lt.s32.totalorder %s20, 3
      %s265 = scalar_select %p264, %s20, 3
      %s266 = smul.addr %s263, 4
      %s267 = sadd.s32 %s265, %s266
      %s268 = smul.addr %s267, 8
      %s269 = scalar_lea.vmem %s4, %s268
      %p270 = scmp.lt.s32.totalorder %s19, 1
      %s271 = scalar_select %p270, %s19, 1
      %p272 = scmp.lt.s32.totalorder %s20, 3
      %s273 = scalar_select %p272, %s20, 3
      %s274 = smul.addr %s271, 4
      %s275 = sadd.s32 %s273, %s274
      %s276 = smul.addr %s275, 8
      %s277 = scalar_lea.vmem %s0, %s276
      %p278 = scmp.lt.s32.totalorder %s19, 1
      %s279 = scalar_select %p278, %s19, 1
      %p280 = scmp.lt.s32.totalorder %s20, 3
      %s281 = scalar_select %p280, %s20, 3
      %s282 = smul.addr %s279, 4
      %s283 = sadd.s32 %s281, %s282
      %s284 = smul.addr %s283, 8
      %s285 = scalar_lea.vmem %s1, %s284
      %p286 = scmp.lt.s32.totalorder %s19, 1
      %s287 = scalar_select %p286, %s19, 1
      %p288 = scmp.lt.s32.totalorder %s20, 3
      %s289 = scalar_select %p288, %s20, 3
      %s290 = smul.addr %s287, 4
      %s291 = sadd.s32 %s289, %s290
      %s292 = smul.addr %s291, 8
      %s293 = scalar_lea.vmem %s2, %s292
      %p294 = scmp.lt.s32.totalorder %s19, 1
      %s295 = scalar_select %p294, %s19, 1
      %s296 = scalar_lea.vmem %s3, %s295
      %p297 = scmp.lt.s32.totalorder %s19, 1
      %s298 = scalar_select %p297, %s19, 1
      %p299 = scmp.lt.s32.totalorder %s20, 3
      %s300 = scalar_select %p299, %s20, 3
      %s301 = smul.addr %s298, 4
      %s302 = sadd.s32 %s300, %s301
      %s303 = smul.addr %s302, 8
      %s304 = scalar_lea.vmem %s4, %s303
      %v305 = vld [vmem:[%s277] sm:$0xff]
      %v306 = vld [vmem:[%s285] sm:$0xff]
      %v307 = vld [vmem:[%s293] sm:$0xff]
      %vm308 = vcmask 64512
      %v310 = vsel %vm308, %v305, 0
      %v313 = vsel %vm308, %v306, 0
      %315 = vmatprep.subr.mxu0 0.0
      %316 = vmatpush1.xpose.msra.mxu0 %v313
      %317 = vmatprep.subr.mxu0 0.0
      %318 = vmatpush1.xpose.msra.mxu0 0.0
      %319 = vmatprep.subr.mxu0 0.0
      %320 = vmatpush1.xpose.msra.mxu0 0.0
      %321 = vmatprep.subr.mxu0 0.0
      %322 = vmatpush1.xpose.msra.mxu0 0.0
      %323 = vmatprep.subr.mxu0 0.0
      %324 = vmatpush1.xpose.msra.mxu0 0.0
      %325 = vmatprep.subr.mxu0 0.0
      %326 = vmatpush1.xpose.msra.mxu0 0.0
      %327 = vmatprep.subr.mxu0 0.0
      %328 = vmatpush1.xpose.msra.mxu0 0.0
      %329 = vmatprep.subr.mxu0 0.0
      %330 = vmatpush1.xpose.msra.mxu0 0.0
      %331 = vmatprep.subr.mxu0 0.0
      %332 = vmatpush1.xpose.msra.mxu0 0.0
      %333 = vmatprep.subr.mxu0 0.0
      %334 = vmatpush1.xpose.msra.mxu0 0.0
      %335 = vmatprep.subr.mxu0 0.0
      %336 = vmatpush1.xpose.msra.mxu0 0.0
      %337 = vmatprep.subr.mxu0 0.0
      %338 = vmatpush1.xpose.msra.mxu0 0.0
      %339 = vmatprep.subr.mxu0 0.0
      %340 = vmatpush1.xpose.msra.mxu0 0.0
      %341 = vmatprep.subr.mxu0 0.0
      %342 = vmatpush1.xpose.msra.mxu0 0.0
      %343 = vmatprep.subr.mxu0 0.0
      %344 = vmatpush1.xpose.msra.mxu0 0.0
      %345 = vmatprep.subr.mxu0 0.0
      %346 = vmatpush1.xpose.msra.mxu0 0.0
      %347 = vmatprep.subr.mxu0 0.0
      %348 = vmatpush1.xpose.msra.mxu0 0.0
      %349 = vmatprep.subr.mxu0 0.0
      %350 = vmatpush1.xpose.msra.mxu0 0.0
      %351 = vmatprep.subr.mxu0 0.0
      %352 = vmatpush1.xpose.msra.mxu0 0.0
      %353 = vmatprep.subr.mxu0 0.0
      %354 = vmatpush1.xpose.msra.mxu0 0.0
      %355 = vmatprep.subr.mxu0 0.0
      %356 = vmatpush1.xpose.msra.mxu0 0.0
      %357 = vmatprep.subr.mxu0 0.0
      %358 = vmatpush1.xpose.msra.mxu0 0.0
      %359 = vmatprep.subr.mxu0 0.0
      %360 = vmatpush1.xpose.msra.mxu0 0.0
      %361 = vmatprep.subr.mxu0 0.0
      %362 = vmatpush1.xpose.msra.mxu0 0.0
      %363 = vmatprep.subr.mxu0 0.0
      %364 = vmatpush1.xpose.msra.mxu0 0.0
      %365 = vmatprep.subr.mxu0 0.0
      %366 = vmatpush1.xpose.msra.mxu0 0.0
      %367 = vmatprep.subr.mxu0 0.0
      %368 = vmatpush1.xpose.msra.mxu0 0.0
      %369 = vmatprep.subr.mxu0 0.0
      %370 = vmatpush1.xpose.msra.mxu0 0.0
      %371 = vmatprep.subr.mxu0 0.0
      %372 = vmatpush1.xpose.msra.mxu0 0.0
      %373 = vmatprep.subr.mxu0 0.0
      %374 = vmatpush1.xpose.msra.mxu0 0.0
      %375 = vmatprep.subr.mxu0 0.0
      %376 = vmatpush1.xpose.msra.mxu0 0.0
      %377 = vmatprep.subr.mxu0 0.0
      %378 = vmatpush1.xpose.msra.mxu0 0.0
      %379 = vmatprep.mubr.f32.mxu0 0.0
      %380 = vmatmul.mubr.f32.gmra.mrb[0].mxu0 %v310
      %v381 = vpop.f32.mrb[0].mxu0
      %v382 = vadd.f32 0.0, %v381
      %v383 = vpop.f32.mrb[0].mxu0
      %384 = vdwg.mxu0
      %v385 = vmul.f32 %v382, 0.35355338
      %v386 = vld [vmem:[%s296] sm:$0x1]
      %vm387 = vcmp.eq.f32.partialorder %v386, 0.0
      %v388 = vsel %vm387, 1, 0
      %v389 = vlaneseq
      %v390 = vshrl.u32 %v389, 7
      %v391 = vsub.s32 0, %v390
      %v392 = vrot.slane %v388, %v391
      %vm393 = vcmp.eq.s32.totalorder %v392, 1
      %v394 = vsel %vm393, -1e+10, %v385
      %v395 = vsel %vm308, %v394, -inf
      %396 = vmax.xlane.f32.xlu0 %v395
      %v397 = vpop.xlane.xlu0 %396
      %v398 = vsub.f32 %v394, %v397
      %v399 = vmul.f32 %v398, 1.442695
      %v400 = vpow.pop %v399
      %v401 = vsel %vm308, %v400, 0.0
      %402 = vadd.xlane.f32.xlu0 %v401
      %v403 = vpop.xlane.xlu0 %402
      %v404 = vrcp.pop %v403
      %v405 = vmul.f32 %v400, %v404
      %v407 = vsel %vm308, %v405, 0
      %409 = vmatprep.subr.mxu0 0.0
      %410 = vmatpush1.msra.mxu0 %v307
      %411 = vmatprep.subr.mxu0 0.0
      %412 = vmatpush1.msra.mxu0 0.0
      %413 = vmatprep.subr.mxu0 0.0
      %414 = vmatpush1.msra.mxu0 0.0
      %415 = vmatprep.subr.mxu0 0.0
      %416 = vmatpush1.msra.mxu0 0.0
      %417 = vmatprep.subr.mxu0 0.0
      %418 = vmatpush1.msra.mxu0 0.0
      %419 = vmatprep.subr.mxu0 0.0
      %420 = vmatpush1.msra.mxu0 0.0
      %421 = vmatprep.subr.mxu0 0.0
      %422 = vmatpush1.msra.mxu0 0.0
      %423 = vmatprep.subr.mxu0 0.0
      %424 = vmatpush1.msra.mxu0 0.0
      %425 = vmatprep.subr.mxu0 0.0
      %426 = vmatpush1.msra.mxu0 0.0
      %427 = vmatprep.subr.mxu0 0.0
      %428 = vmatpush1.msra.mxu0 0.0
      %429 = vmatprep.subr.mxu0 0.0
      %430 = vmatpush1.msra.mxu0 0.0
      %431 = vmatprep.subr.mxu0 0.0
      %432 = vmatpush1.msra.mxu0 0.0
      %433 = vmatprep.subr.mxu0 0.0
      %434 = vmatpush1.msra.mxu0 0.0
      %435 = vmatprep.subr.mxu0 0.0
      %436 = vmatpush1.msra.mxu0 0.0
      %437 = vmatprep.subr.mxu0 0.0
      %438 = vmatpush1.msra.mxu0 0.0
      %439 = vmatprep.subr.mxu0 0.0
      %440 = vmatpush1.msra.mxu0 0.0
      %441 = vmatprep.subr.mxu0 0.0
      %442 = vmatpush1.msra.mxu0 0.0
      %443 = vmatprep.subr.mxu0 0.0
      %444 = vmatpush1.msra.mxu0 0.0
      %445 = vmatprep.subr.mxu0 0.0
      %446 = vmatpush1.msra.mxu0 0.0
      %447 = vmatprep.subr.mxu0 0.0
      %448 = vmatpush1.msra.mxu0 0.0
      %449 = vmatprep.subr.mxu0 0.0
      %450 = vmatpush1.msra.mxu0 0.0
      %451 = vmatprep.subr.mxu0 0.0
      %452 = vmatpush1.msra.mxu0 0.0
      %453 = vmatprep.subr.mxu0 0.0
      %454 = vmatpush1.msra.mxu0 0.0
      %455 = vmatprep.subr.mxu0 0.0
      %456 = vmatpush1.msra.mxu0 0.0
      %457 = vmatprep.subr.mxu0 0.0
      %458 = vmatpush1.msra.mxu0 0.0
      %459 = vmatprep.subr.mxu0 0.0
      %460 = vmatpush1.msra.mxu0 0.0
      %461 = vmatprep.subr.mxu0 0.0
      %462 = vmatpush1.msra.mxu0 0.0
      %463 = vmatprep.subr.mxu0 0.0
      %464 = vmatpush1.msra.mxu0 0.0
      %465 = vmatprep.subr.mxu0 0.0
      %466 = vmatpush1.msra.mxu0 0.0
      %467 = vmatprep.subr.mxu0 0.0
      %468 = vmatpush1.msra.mxu0 0.0
      %469 = vmatprep.subr.mxu0 0.0
      %470 = vmatpush1.msra.mxu0 0.0
      %471 = vmatprep.subr.mxu0 0.0
      %472 = vmatpush1.msra.mxu0 0.0
      %473 = vmatprep.mubr.f32.mxu0 0.0
      %474 = vmatmul.mubr.f32.gmra.mrb[0].mxu0 %v407
      %v475 = vpop.f32.mrb[0].mxu0
      %v476 = vadd.f32 0.0, %v475
      %v477 = vpop.f32.mrb[0].mxu0
      %478 = vdwg.mxu0
      %479 = vst.msk [vmem:[%s304] sm:$0xff] %vm308, %v476
      %p480 = scmp.lt.s32.totalorder %s19, 1
      %s481 = scalar_select %p480, %s19, 1
      %p482 = scmp.lt.s32.totalorder %s20, 3
      %s483 = scalar_select %p482, %s20, 3
      %s484 = smul.addr %s481, 4
      %s485 = sadd.s32 %s483, %s484
      %s486 = smul.addr %s485, 8
      %s487 = scalar_lea.vmem %s4, %s486
      // Predicated region
      $region37: #{transformer_encoder_layer_forward.12} parent=35 // pred_check
        %p488 = pneg %p157
      $region38: #{transformer_encoder_layer_forward.12} parent=35 // pred_check_branch
        %490 = sbr.rel (%p488) target = $region40
      $region39: #{transformer_encoder_layer_forward.12} parent=35 // pred_region
        _
      $region40: #{transformer_encoder_layer_forward.12} parent=35 // pred_fallthru
        _
    $region36: #{transformer_encoder_layer_forward.12} parent=5 // pred_fallthru
      _
    %p491 = scmp.le.s32.totalorder 2, %s10
    // Predicated region
    $region41: #{transformer_encoder_layer_forward.12} parent=5 // pred_check
      %p492 = pneg %p491
    $region42: #{transformer_encoder_layer_forward.12} parent=5 // pred_check_branch
      %494 = sbr.rel (%p492) target = $region44
    $region43: #{transformer_encoder_layer_forward.12} parent=5 // pred_region
      %s495 = ssub.s32 %s10, 2
      // Predicated region
      $region45: #{transformer_encoder_layer_forward.12} parent=43 // pred_check
        %p496 = pneg %p163
      $region46: #{transformer_encoder_layer_forward.12} parent=43 // pred_check_branch
        %498 = sbr.rel (%p496) target = $region48
      $region47: #{transformer_encoder_layer_forward.12} parent=43 // pred_region
        %p499 = scmp.lt.s32.totalorder %s21, 1
        %s500 = scalar_select %p499, %s21, 1
        %p501 = scmp.lt.s32.totalorder %s22, 3
        %s502 = scalar_select %p501, %s22, 3
        %s503 = smul.addr %s500, 4
        %s504 = sadd.s32 %s502, %s503
        %s505 = smul.addr %s504, 8
        %s506 = scalar_lea.vmem %s4, %s505
      $region48: #{transformer_encoder_layer_forward.12} parent=43 // pred_fallthru
        _
    $region44: #{transformer_encoder_layer_forward.12} parent=5 // pred_fallthru
      _
  $region6: #{transformer_encoder_layer_forward.12} parent=0 // loop_footer
    %s14 = sadd.s32 1, %s10
  $region7: #{transformer_encoder_layer_forward.12} parent=0 // loop_footer_branch
    %9 = sbr.rel target = $region3
  $region8: #{transformer_encoder_layer_forward.12} parent=0 // loop_exit
    _

// kernel: transformer_encoder_layer_forward.15
$region0: #{transformer_encoder_layer_forward.15}
  #allocation0 [shape = 'u32[]', space=smem, size = 0x4, offset = 0x4, fixed_abs, tag = 'smem constant byte address 0x4 - core index']
  #allocation1 [shape = 'u32[144,128]{1,0:T(1,128)}', space=vmem, size = 0x12000, scoped, tag = 'internal scratch']
  #allocation2 [shape = 'f32[16,64]{1,0:T(8,128)}', space=vmem, size = 0x2000, scoped, tag = 'scratch operand']
  %s0 = inlined_call_operand.vmem [shape: f32[16,32], index: 0, kind: input, shape index: {}]
  %s1 = inlined_call_operand.vmem [shape: f32[32,64], index: 1, kind: input, shape index: {}]
  %s2 = inlined_call_operand.vmem [shape: f32[1,64], index: 2, kind: input, shape index: {}]
  %s3 = inlined_call_operand.vmem [shape: f32[16,64], index: 3, kind: output, shape index: {}]
  %s4 = sld [smem:[#allocation0]]
  $region30: #{transformer_encoder_layer_forward.15} parent=0
    _
  %s6 = ssub.s32 1, %s4
  %s7 = scalar_select 0, %s6, %s4
  // Predicated region
  $region2: #{transformer_encoder_layer_forward.15} parent=0 // pred_check
    _
  $region3: #{transformer_encoder_layer_forward.15} parent=0 // pred_check_branch
    %9 = sbr.rel (0) target = $region5
  $region4: #{transformer_encoder_layer_forward.15} parent=0 // pred_region
    _
  $region5: #{transformer_encoder_layer_forward.15} parent=0 // pred_fallthru
    _
  // Predicated region
  $region6: #{transformer_encoder_layer_forward.15} parent=0 // pred_check
    _
  $region7: #{transformer_encoder_layer_forward.15} parent=0 // pred_check_branch
    %11 = sbr.rel (0) target = $region9
  $region8: #{transformer_encoder_layer_forward.15} parent=0 // pred_region
    _
  $region9: #{transformer_encoder_layer_forward.15} parent=0 // pred_fallthru
    _
  // Predicated region
  $region10: #{transformer_encoder_layer_forward.15} parent=0 // pred_check
    _
  $region11: #{transformer_encoder_layer_forward.15} parent=0 // pred_check_branch
    %13 = sbr.rel (0) target = $region13
  $region12: #{transformer_encoder_layer_forward.15} parent=0 // pred_region
    _
  $region13: #{transformer_encoder_layer_forward.15} parent=0 // pred_fallthru
    _
  %p14 = scmp.eq.s32.totalorder 0, 0
  // Predicated region
  $region14: #{transformer_encoder_layer_forward.15} parent=0 // pred_check
    %p15 = pneg %p14
  $region15: #{transformer_encoder_layer_forward.15} parent=0 // pred_check_branch
    %17 = sbr.rel (%p15) target = $region17
  $region16: #{transformer_encoder_layer_forward.15} parent=0 // pred_region
    %vm18 = vcmask 523264
    %19 = vst.msk [vmem:[#allocation2] sm:$0xff] %vm18, 0.0
    %20 = vst.msk [vmem:[#allocation2 + $0x8] sm:$0xff] %vm18, 0.0
  $region17: #{transformer_encoder_layer_forward.15} parent=0 // pred_fallthru
    _
  %v21 = vld [vmem:[#allocation2] sm:$0xff]
  %v22 = vld [vmem:[#allocation2 + $0x8] sm:$0xff]
  %v23 = vld [vmem:[%s0] sm:$0xff]
  %v24 = vld [vmem:[%s0 + $0x8] sm:$0xff]
  %v25 = vld [vmem:[%s1] sm:$0xff]
  %v26 = vld [vmem:[%s1 + $0x8] sm:$0xff]
  %v27 = vld [vmem:[%s1 + $0x10] sm:$0xff]
  %v28 = vld [vmem:[%s1 + $0x18] sm:$0xff]
  %vm29 = vcmask 261120
  %v31 = vsel %vm29, %v23, 0
  %v34 = vsel %vm29, %v24, 0
  %36 = vmatprep.subr.mxu0 0.0
  %37 = vmatpush1.msra.mxu0 %v25
  %38 = vmatprep.subr.mxu0 0.0
  %39 = vmatpush1.msra.mxu0 %v26
  %40 = vmatprep.subr.mxu0 0.0
  %41 = vmatpush1.msra.mxu0 %v27
  %42 = vmatprep.subr.mxu0 0.0
  %43 = vmatpush1.msra.mxu0 %v28
  %44 = vmatprep.subr.mxu0 0.0
  %45 = vmatpush1.msra.mxu0 0.0
  %46 = vmatprep.subr.mxu0 0.0
  %47 = vmatpush1.msra.mxu0 0.0
  %48 = vmatprep.subr.mxu0 0.0
  %49 = vmatpush1.msra.mxu0 0.0
  %50 = vmatprep.subr.mxu0 0.0
  %51 = vmatpush1.msra.mxu0 0.0
  %52 = vmatprep.subr.mxu0 0.0
  %53 = vmatpush1.msra.mxu0 0.0
  %54 = vmatprep.subr.mxu0 0.0
  %55 = vmatpush1.msra.mxu0 0.0
  %56 = vmatprep.subr.mxu0 0.0
  %57 = vmatpush1.msra.mxu0 0.0
  %58 = vmatprep.subr.mxu0 0.0
  %59 = vmatpush1.msra.mxu0 0.0
  %60 = vmatprep.subr.mxu0 0.0
  %61 = vmatpush1.msra.mxu0 0.0
  %62 = vmatprep.subr.mxu0 0.0
  %63 = vmatpush1.msra.mxu0 0.0
  %64 = vmatprep.subr.mxu0 0.0
  %65 = vmatpush1.msra.mxu0 0.0
  %66 = vmatprep.subr.mxu0 0.0
  %67 = vmatpush1.msra.mxu0 0.0
  %68 = vmatprep.subr.mxu0 0.0
  %69 = vmatpush1.msra.mxu0 0.0
  %70 = vmatprep.subr.mxu0 0.0
  %71 = vmatpush1.msra.mxu0 0.0
  %72 = vmatprep.subr.mxu0 0.0
  %73 = vmatpush1.msra.mxu0 0.0
  %74 = vmatprep.subr.mxu0 0.0
  %75 = vmatpush1.msra.mxu0 0.0
  %76 = vmatprep.subr.mxu0 0.0
  %77 = vmatpush1.msra.mxu0 0.0
  %78 = vmatprep.subr.mxu0 0.0
  %79 = vmatpush1.msra.mxu0 0.0
  %80 = vmatprep.subr.mxu0 0.0
  %81 = vmatpush1.msra.mxu0 0.0
  %82 = vmatprep.subr.mxu0 0.0
  %83 = vmatpush1.msra.mxu0 0.0
  %84 = vmatprep.subr.mxu0 0.0
  %85 = vmatpush1.msra.mxu0 0.0
  %86 = vmatprep.subr.mxu0 0.0
  %87 = vmatpush1.msra.mxu0 0.0
  %88 = vmatprep.subr.mxu0 0.0
  %89 = vmatpush1.msra.mxu0 0.0
  %90 = vmatprep.subr.mxu0 0.0
  %91 = vmatpush1.msra.mxu0 0.0
  %92 = vmatprep.subr.mxu0 0.0
  %93 = vmatpush1.msra.mxu0 0.0
  %94 = vmatprep.subr.mxu0 0.0
  %95 = vmatpush1.msra.mxu0 0.0
  %96 = vmatprep.subr.mxu0 0.0
  %97 = vmatpush1.msra.mxu0 0.0
  %98 = vmatprep.subr.mxu0 0.0
  %99 = vmatpush1.msra.mxu0 0.0
  %100 = vmatprep.mubr.f32.mxu0 0.0
  %101 = vmatmul.mubr.f32.gmra.mrb[0].mxu0 %v31
  %v102 = vpop.f32.mrb[0].mxu0
  %v103 = vadd.f32 0.0, %v102
  %v104 = vpop.f32.mrb[0].mxu0
  %105 = vmatprep.mubr.f32.mxu0 0.0
  %106 = vmatmul.mubr.f32.gmra.mrb[0].mxu0 %v34
  %v107 = vpop.f32.mrb[0].mxu0
  %v108 = vadd.f32 0.0, %v107
  %v109 = vpop.f32.mrb[0].mxu0
  %110 = vdwg.mxu0
  %v111 = vadd.f32 %v21, %v103
  %v112 = vadd.f32 %v22, %v108
  %vm113 = vcmask 523264
  %114 = vst.msk [vmem:[#allocation2] sm:$0xff] %vm113, %v111
  %115 = vst.msk [vmem:[#allocation2 + $0x8] sm:$0xff] %vm113, %v112
  // Predicated region
  $region18: #{transformer_encoder_layer_forward.15} parent=0 // pred_check
    %p116 = pneg %p14
  $region19: #{transformer_encoder_layer_forward.15} parent=0 // pred_check_branch
    %118 = sbr.rel (%p116) target = $region21
  $region20: #{transformer_encoder_layer_forward.15} parent=0 // pred_region
    %v119 = vld [vmem:[#allocation2] sm:$0xff]
    %v120 = vld [vmem:[#allocation2 + $0x8] sm:$0xff]
    %v121 = vld [vmem:[%s2] sm:$0x1]
    %v123 = vlaneseq
    %v124 = vshrl.u32 %v123, 7
    %v125 = vsub.s32 0, %v124
    %v126 = vrot.slane %v121, %v125
    %v128 = vadd.f32 %v119, %v126
    %v129 = vadd.f32 %v120, %v126
    %v130 = vmul.f32 %v128, 0.5
    %v131 = vmul.f32 %v129, 0.5
    %v132 = vmul.f32 %v128, 0.044715
    %v133 = vmul.f32 %v129, 0.044715
    %v134 = vmul.f32 %v132, %v128
    %v135 = vmul.f32 %v133, %v129
    %v136 = vmul.f32 %v134, %v128
    %v137 = vmul.f32 %v135, %v129
    %v138 = vadd.f32 %v128, %v136
    %v139 = vadd.f32 %v129, %v137
    %v140 = vmul.f32 %v138, 0.7978846
    %v141 = vmul.f32 %v139, 0.7978846
    %v142 = vtanh.pop %v140
    %v143 = vtanh.pop %v141
    %v144 = vadd.f32 %v142, 1.0
    %v145 = vadd.f32 %v143, 1.0
    %v146 = vmul.f32 %v130, %v144
    %v147 = vmul.f32 %v131, %v145
    %148 = vst.msk [vmem:[%s3] sm:$0xff] %vm113, %v146
    %149 = vst.msk [vmem:[%s3 + $0x8] sm:$0xff] %vm113, %v147
  $region21: #{transformer_encoder_layer_forward.15} parent=0 // pred_fallthru
    _
  // Predicated region
  $region22: #{transformer_encoder_layer_forward.15} parent=0 // pred_check
    _
  $region23: #{transformer_encoder_layer_forward.15} parent=0 // pred_check_branch
    %151 = sbr.rel (0) target = $region25
  $region24: #{transformer_encoder_layer_forward.15} parent=0 // pred_region
    _
  $region25: #{transformer_encoder_layer_forward.15} parent=0 // pred_fallthru
    _
  // Predicated region
  $region26: #{transformer_encoder_layer_forward.15} parent=0 // pred_check
    _
  $region27: #{transformer_encoder_layer_forward.15} parent=0 // pred_check_branch
    %153 = sbr.rel (0) target = $region29
  $region28: #{transformer_encoder_layer_forward.15} parent=0 // pred_region
    _
  $region29: #{transformer_encoder_layer_forward.15} parent=0 // pred_fallthru
    _

// kernel: transformer_encoder_layer_forward.17
$region0: #{transformer_encoder_layer_forward.17}
  #allocation0 [shape = 'u32[]', space=smem, size = 0x4, offset = 0x4, fixed_abs, tag = 'smem constant byte address 0x4 - core index']
  #allocation1 [shape = 'u32[144,128]{1,0:T(1,128)}', space=vmem, size = 0x12000, scoped, tag = 'internal scratch']
  %s0 = inlined_call_operand.vmem [shape: f32[16,32], index: 0, kind: input, shape index: {}]
  %s1 = inlined_call_operand.vmem [shape: f32[16,32], index: 1, kind: input, shape index: {}]
  %s2 = inlined_call_operand.vmem [shape: f32[1,32], index: 2, kind: input, shape index: {}]
  %s3 = inlined_call_operand.vmem [shape: f32[1,32], index: 3, kind: input, shape index: {}]
  %s4 = inlined_call_operand.hbm [shape: f32[16,32], index: 4, kind: output, shape index: {}]
  %s5 = sld [smem:[#allocation0]]
  $region26: #{transformer_encoder_layer_forward.17} parent=0
    _
  %s7 = ssub.s32 1, %s5
  %s8 = scalar_select 0, %s7, %s5
  $region1: #{transformer_encoder_layer_forward.17} parent=0
    #allocation2 [shape = 'u8[8192]{0}', space=vmem, size = 0x2000, scoped, tag = 'output window, operand 0, single buffered']
    #allocation3 [shape = 's32[1]{0}', space=sflag, size = 0x4, scoped, tag = 'scoped memory for transformer_encoder_layer_forward.17']
    %9 = vsyncpa [#allocation3], 0
    // Predicated region
    $region2: #{transformer_encoder_layer_forward.17} parent=1 // pred_check
      _
    $region3: #{transformer_encoder_layer_forward.17} parent=1 // pred_check_branch
      %11 = sbr.rel (0) target = $region5
    $region4: #{transformer_encoder_layer_forward.17} parent=1 // pred_region
      _
    $region5: #{transformer_encoder_layer_forward.17} parent=1 // pred_fallthru
      _
    // Predicated region
    $region6: #{transformer_encoder_layer_forward.17} parent=1 // pred_check
      _
    $region7: #{transformer_encoder_layer_forward.17} parent=1 // pred_check_branch
      %13 = sbr.rel (0) target = $region9
    $region8: #{transformer_encoder_layer_forward.17} parent=1 // pred_region
      _
    $region9: #{transformer_encoder_layer_forward.17} parent=1 // pred_fallthru
      _
    // Predicated region
    $region10: #{transformer_encoder_layer_forward.17} parent=1 // pred_check
      _
    $region11: #{transformer_encoder_layer_forward.17} parent=1 // pred_check_branch
      %15 = sbr.rel (0) target = $region13
    $region12: #{transformer_encoder_layer_forward.17} parent=1 // pred_region
      _
    $region13: #{transformer_encoder_layer_forward.17} parent=1 // pred_fallthru
      _
    // Predicated region
    $region14: #{transformer_encoder_layer_forward.17} parent=1 // pred_check
      _
    $region15: #{transformer_encoder_layer_forward.17} parent=1 // pred_check_branch
      %17 = sbr.rel (0) target = $region17
    $region16: #{transformer_encoder_layer_forward.17} parent=1 // pred_region
      _
    $region17: #{transformer_encoder_layer_forward.17} parent=1 // pred_fallthru
      _
    %v18 = vld [vmem:[%s0] sm:$0xff]
    %v19 = vld [vmem:[%s0 + $0x8] sm:$0xff]
    %v20 = vld [vmem:[%s1] sm:$0xff]
    %v21 = vld [vmem:[%s1 + $0x8] sm:$0xff]
    %v22 = vadd.f32 %v18, %v20
    %v23 = vadd.f32 %v19, %v21
    %vm24 = vcmask 261120
    %v25 = vsel %vm24, %v22, 0.0
    %26 = vadd.xlane.f32.xlu0 %v25
    %v27 = vpop.xlane.xlu0 %26
    %v28 = vsel %vm24, %v23, 0.0
    %29 = vadd.xlane.f32.xlu0 %v28
    %v30 = vpop.xlane.xlu0 %29
    %v31 = vrcp.pop 32.0
    %v32 = vmul.f32 %v27, %v31
    %v33 = vmul.f32 %v30, %v31
    %v34 = vsub.f32 %v22, %v32
    %v35 = vsub.f32 %v23, %v33
    %v36 = vmul.f32 %v34, %v34
    %v37 = vmul.f32 %v35, %v35
    %v38 = vsel %vm24, %v36, 0.0
    %39 = vadd.xlane.f32.xlu0 %v38
    %v40 = vpop.xlane.xlu0 %39
    %v41 = vsel %vm24, %v37, 0.0
    %42 = vadd.xlane.f32.xlu0 %v41
    %v43 = vpop.xlane.xlu0 %42
    %v44 = vmul.f32 %v40, %v31
    %v45 = vmul.f32 %v43, %v31
    %v46 = vadd.f32 %v44, 0.001
    %v47 = vadd.f32 %v45, 0.001
    %v48 = vrsqrt.pop %v46
    %v49 = vrsqrt.pop %v47
    %v50 = vmul.f32 %v34, %v48
    %v51 = vmul.f32 %v35, %v49
    %v52 = vld [vmem:[%s2] sm:$0x1]
    %v54 = vlaneseq
    %v55 = vshrl.u32 %v54, 7
    %v56 = vsub.s32 0, %v55
    %v57 = vrot.slane %v52, %v56
    %v59 = vmul.f32 %v50, %v57
    %v60 = vmul.f32 %v51, %v57
    %v61 = vld [vmem:[%s3] sm:$0x1]
    %v63 = vlaneseq
    %v64 = vshrl.u32 %v63, 7
    %v65 = vsub.s32 0, %v64
    %v66 = vrot.slane %v61, %v65
    %v68 = vadd.f32 %v59, %v66
    %v69 = vadd.f32 %v60, %v66
    %70 = vst.msk [vmem:[#allocation2] sm:$0xff] %vm24, %v68
    %71 = vst.msk [vmem:[#allocation2 + $0x8] sm:$0xff] %vm24, %v69
    // Predicated region
    $region18: #{transformer_encoder_layer_forward.17} parent=1 // pred_check
      _
    $region19: #{transformer_encoder_layer_forward.17} parent=1 // pred_check_branch
      %73 = sbr.rel (0) target = $region21
    $region20: #{transformer_encoder_layer_forward.17} parent=1 // pred_region
      %s75 = ssub.s32 256, 256
      %76 = vsyncadd [#allocation3], %s75
      %s77 = sshll.u32 [#allocation2], 4
      %s78 = int_to_ptr.vmem [resolvable:$true] %s77
      %83 = dma.vmem_to_hbm [thread:$0]  %s78, 256, %s4, [#allocation3], 128, 128, 8
    $region21: #{transformer_encoder_layer_forward.17} parent=1 // pred_fallthru
      _
    // Predicated region
    $region22: #{transformer_encoder_layer_forward.17} parent=1 // pred_check
      _
    $region23: #{transformer_encoder_layer_forward.17} parent=1 // pred_check_branch
      %85 = sbr.rel (0) target = $region25
    $region24: #{transformer_encoder_layer_forward.17} parent=1 // pred_region
      %86 = dma.done [#allocation3], 256
    $region25: #{transformer_encoder_layer_forward.17} parent=1 // pred_fallthru
      _
    %87 = vsyncpa [#allocation3], 1

// kernel: transformer_encoder_layer_forward.16
$region0: #{transformer_encoder_layer_forward.16}
  #allocation0 [shape = 'u32[]', space=smem, size = 0x4, offset = 0x4, fixed_abs, tag = 'smem constant byte address 0x4 - core index']
  #allocation1 [shape = 'u32[144,128]{1,0:T(1,128)}', space=vmem, size = 0x12000, scoped, tag = 'internal scratch']
  #allocation2 [shape = 'f32[16,32]{1,0:T(8,128)}', space=vmem, size = 0x2000, scoped, tag = 'scratch operand']
  %s0 = inlined_call_operand.vmem [shape: f32[16,64], index: 0, kind: input, shape index: {}]
  %s1 = inlined_call_operand.vmem [shape: f32[64,32], index: 1, kind: input, shape index: {}]
  %s2 = inlined_call_operand.vmem [shape: f32[1,32], index: 2, kind: input, shape index: {}]
  %s3 = inlined_call_operand.vmem [shape: f32[16,32], index: 3, kind: output, shape index: {}]
  %s4 = sld [smem:[#allocation0]]
  $region30: #{transformer_encoder_layer_forward.16} parent=0
    _
  %s6 = ssub.s32 1, %s4
  %s7 = scalar_select 0, %s6, %s4
  // Predicated region
  $region2: #{transformer_encoder_layer_forward.16} parent=0 // pred_check
    _
  $region3: #{transformer_encoder_layer_forward.16} parent=0 // pred_check_branch
    %9 = sbr.rel (0) target = $region5
  $region4: #{transformer_encoder_layer_forward.16} parent=0 // pred_region
    _
  $region5: #{transformer_encoder_layer_forward.16} parent=0 // pred_fallthru
    _
  // Predicated region
  $region6: #{transformer_encoder_layer_forward.16} parent=0 // pred_check
    _
  $region7: #{transformer_encoder_layer_forward.16} parent=0 // pred_check_branch
    %11 = sbr.rel (0) target = $region9
  $region8: #{transformer_encoder_layer_forward.16} parent=0 // pred_region
    _
  $region9: #{transformer_encoder_layer_forward.16} parent=0 // pred_fallthru
    _
  // Predicated region
  $region10: #{transformer_encoder_layer_forward.16} parent=0 // pred_check
    _
  $region11: #{transformer_encoder_layer_forward.16} parent=0 // pred_check_branch
    %13 = sbr.rel (0) target = $region13
  $region12: #{transformer_encoder_layer_forward.16} parent=0 // pred_region
    _
  $region13: #{transformer_encoder_layer_forward.16} parent=0 // pred_fallthru
    _
  %p14 = scmp.eq.s32.totalorder 0, 0
  // Predicated region
  $region14: #{transformer_encoder_layer_forward.16} parent=0 // pred_check
    %p15 = pneg %p14
  $region15: #{transformer_encoder_layer_forward.16} parent=0 // pred_check_branch
    %17 = sbr.rel (%p15) target = $region17
  $region16: #{transformer_encoder_layer_forward.16} parent=0 // pred_region
    %vm18 = vcmask 261120
    %19 = vst.msk [vmem:[#allocation2] sm:$0xff] %vm18, 0.0
    %20 = vst.msk [vmem:[#allocation2 + $0x8] sm:$0xff] %vm18, 0.0
  $region17: #{transformer_encoder_layer_forward.16} parent=0 // pred_fallthru
    _
  %v21 = vld [vmem:[#allocation2] sm:$0xff]
  %v22 = vld [vmem:[#allocation2 + $0x8] sm:$0xff]
  %v23 = vld [vmem:[%s0] sm:$0xff]
  %v24 = vld [vmem:[%s0 + $0x8] sm:$0xff]
  %v25 = vld [vmem:[%s1] sm:$0xff]
  %v26 = vld [vmem:[%s1 + $0x8] sm:$0xff]
  %v27 = vld [vmem:[%s1 + $0x10] sm:$0xff]
  %v28 = vld [vmem:[%s1 + $0x18] sm:$0xff]
  %v29 = vld [vmem:[%s1 + $0x20] sm:$0xff]
  %v30 = vld [vmem:[%s1 + $0x28] sm:$0xff]
  %v31 = vld [vmem:[%s1 + $0x30] sm:$0xff]
  %v32 = vld [vmem:[%s1 + $0x38] sm:$0xff]
  %vm33 = vcmask 523264
  %v35 = vsel %vm33, %v23, 0
  %v38 = vsel %vm33, %v24, 0
  %40 = vmatprep.subr.mxu0 0.0
  %41 = vmatpush1.msra.mxu0 %v25
  %42 = vmatprep.subr.mxu0 0.0
  %43 = vmatpush1.msra.mxu0 %v26
  %44 = vmatprep.subr.mxu0 0.0
  %45 = vmatpush1.msra.mxu0 %v27
  %46 = vmatprep.subr.mxu0 0.0
  %47 = vmatpush1.msra.mxu0 %v28
  %48 = vmatprep.subr.mxu0 0.0
  %49 = vmatpush1.msra.mxu0 %v29
  %50 = vmatprep.subr.mxu0 0.0
  %51 = vmatpush1.msra.mxu0 %v30
  %52 = vmatprep.subr.mxu0 0.0
  %53 = vmatpush1.msra.mxu0 %v31
  %54 = vmatprep.subr.mxu0 0.0
  %55 = vmatpush1.msra.mxu0 %v32
  %56 = vmatprep.subr.mxu0 0.0
  %57 = vmatpush1.msra.mxu0 0.0
  %58 = vmatprep.subr.mxu0 0.0
  %59 = vmatpush1.msra.mxu0 0.0
  %60 = vmatprep.subr.mxu0 0.0
  %61 = vmatpush1.msra.mxu0 0.0
  %62 = vmatprep.subr.mxu0 0.0
  %63 = vmatpush1.msra.mxu0 0.0
  %64 = vmatprep.subr.mxu0 0.0
  %65 = vmatpush1.msra.mxu0 0.0
  %66 = vmatprep.subr.mxu0 0.0
  %67 = vmatpush1.msra.mxu0 0.0
  %68 = vmatprep.subr.mxu0 0.0
  %69 = vmatpush1.msra.mxu0 0.0
  %70 = vmatprep.subr.mxu0 0.0
  %71 = vmatpush1.msra.mxu0 0.0
  %72 = vmatprep.subr.mxu0 0.0
  %73 = vmatpush1.msra.mxu0 0.0
  %74 = vmatprep.subr.mxu0 0.0
  %75 = vmatpush1.msra.mxu0 0.0
  %76 = vmatprep.subr.mxu0 0.0
  %77 = vmatpush1.msra.mxu0 0.0
  %78 = vmatprep.subr.mxu0 0.0
  %79 = vmatpush1.msra.mxu0 0.0
  %80 = vmatprep.subr.mxu0 0.0
  %81 = vmatpush1.msra.mxu0 0.0
  %82 = vmatprep.subr.mxu0 0.0
  %83 = vmatpush1.msra.mxu0 0.0
  %84 = vmatprep.subr.mxu0 0.0
  %85 = vmatpush1.msra.mxu0 0.0
  %86 = vmatprep.subr.mxu0 0.0
  %87 = vmatpush1.msra.mxu0 0.0
  %88 = vmatprep.subr.mxu0 0.0
  %89 = vmatpush1.msra.mxu0 0.0
  %90 = vmatprep.subr.mxu0 0.0
  %91 = vmatpush1.msra.mxu0 0.0
  %92 = vmatprep.subr.mxu0 0.0
  %93 = vmatpush1.msra.mxu0 0.0
  %94 = vmatprep.subr.mxu0 0.0
  %95 = vmatpush1.msra.mxu0 0.0
  %96 = vmatprep.subr.mxu0 0.0
  %97 = vmatpush1.msra.mxu0 0.0
  %98 = vmatprep.subr.mxu0 0.0
  %99 = vmatpush1.msra.mxu0 0.0
  %100 = vmatprep.subr.mxu0 0.0
  %101 = vmatpush1.msra.mxu0 0.0
  %102 = vmatprep.subr.mxu0 0.0
  %103 = vmatpush1.msra.mxu0 0.0
  %104 = vmatprep.mubr.f32.mxu0 0.0
  %105 = vmatmul.mubr.f32.gmra.mrb[0].mxu0 %v35
  %v106 = vpop.f32.mrb[0].mxu0
  %v107 = vadd.f32 0.0, %v106
  %v108 = vpop.f32.mrb[0].mxu0
  %109 = vmatprep.mubr.f32.mxu0 0.0
  %110 = vmatmul.mubr.f32.gmra.mrb[0].mxu0 %v38
  %v111 = vpop.f32.mrb[0].mxu0
  %v112 = vadd.f32 0.0, %v111
  %v113 = vpop.f32.mrb[0].mxu0
  %114 = vdwg.mxu0
  %v115 = vadd.f32 %v21, %v107
  %v116 = vadd.f32 %v22, %v112
  %vm117 = vcmask 261120
  %118 = vst.msk [vmem:[#allocation2] sm:$0xff] %vm117, %v115
  %119 = vst.msk [vmem:[#allocation2 + $0x8] sm:$0xff] %vm117, %v116
  // Predicated region
  $region18: #{transformer_encoder_layer_forward.16} parent=0 // pred_check
    %p120 = pneg %p14
  $region19: #{transformer_encoder_layer_forward.16} parent=0 // pred_check_branch
    %122 = sbr.rel (%p120) target = $region21
  $region20: #{transformer_encoder_layer_forward.16} parent=0 // pred_region
    %v123 = vld [vmem:[#allocation2] sm:$0xff]
    %v124 = vld [vmem:[#allocation2 + $0x8] sm:$0xff]
    %v125 = vld [vmem:[%s2] sm:$0x1]
    %v127 = vlaneseq
    %v128 = vshrl.u32 %v127, 7
    %v129 = vsub.s32 0, %v128
    %v130 = vrot.slane %v125, %v129
    %v132 = vadd.f32 %v123, %v130
    %v133 = vadd.f32 %v124, %v130
    %134 = vst.msk [vmem:[%s3] sm:$0xff] %vm117, %v132
    %135 = vst.msk [vmem:[%s3 + $0x8] sm:$0xff] %vm117, %v133
  $region21: #{transformer_encoder_layer_forward.16} parent=0 // pred_fallthru
    _
  // Predicated region
  $region22: #{transformer_encoder_layer_forward.16} parent=0 // pred_check
    _
  $region23: #{transformer_encoder_layer_forward.16} parent=0 // pred_check_branch
    %137 = sbr.rel (0) target = $region25
  $region24: #{transformer_encoder_layer_forward.16} parent=0 // pred_region
    _
  $region25: #{transformer_encoder_layer_forward.16} parent=0 // pred_fallthru
    _
  // Predicated region
  $region26: #{transformer_encoder_layer_forward.16} parent=0 // pred_check
    _
  $region27: #{transformer_encoder_layer_forward.16} parent=0 // pred_check_branch
    %139 = sbr.rel (0) target = $region29
  $region28: #{transformer_encoder_layer_forward.16} parent=0 // pred_region
    _
  $region29: #{transformer_encoder_layer_forward.16} parent=0 // pred_fallthru
    _

</llo_original>
